<compile_context>
chip_gen: v6e
topology: v6e:2x2x1
jax: 0.10.0
libtpu: 0.0.40
codegen_flags: <defaults>
</compile_context>

<pallas_src>
from functools import partial

import jax
import jax.numpy as jnp
from jax import lax
from jax.experimental import pallas as pl
from jax.experimental.pallas import tpu as pltpu

HPAD = 128      # lane-dense hidden width
OUTPAD = 128    # lane-dense output width (both heads packed into one slab)


def _vmem_spec():
    return pl.BlockSpec(memory_space=pltpu.MemorySpace.VMEM)


def _round_up(x, m):
    return ((x + m - 1) // m) * m


# ---------------------------------------------------------------------------
# Fused kernel: encoders -> (RGCN + ELU + LayerNorm) x num_layers -> pool+heads
# ---------------------------------------------------------------------------
def _fused_kernel(num_layers, num_relations, hidden, hpad, npad,
                  xin_ref, a_ref, wenc_ref, wrel_ref, wroot_ref, bconv_ref,
                  gamma_ref, beta_ref, p_ref, whead_ref, bhead_ref, o_ref):
    f32 = jnp.float32
    md = xin_ref.dtype  # matmul operand dtype (f32, or bf16 on v6e/v7x)

    # --- node-type encoders, all three fused as one block-diagonal matmul ---
    # xin packs per-type features block-diagonally plus a one-hot bias column,
    # so x = xin @ wenc == [lin_op(x_op); lin_tab(x_tab); lin_col(x_col)]
    x = jnp.dot(xin_ref[...], wenc_ref[...], preferred_element_type=f32)

    # lane mask for LayerNorm over the real hidden lanes only (hoisted)
    lane = lax.broadcasted_iota(jnp.int32, (1, hpad), 1)
    mask = (lane < hidden).astype(f32)
    inv_h = f32(1.0 / hidden)
    gamma = gamma_ref[...]
    beta = beta_ref[...]
    bconv = bconv_ref[...]
    a_mat = a_ref[...]

    for _ in range(num_layers):  # static Python loop: layers stay fused
        xm = x.astype(md)
        # root transform + bias
        h = jnp.dot(xm, wroot_ref[...], preferred_element_type=f32) + bconv
        # mean aggregation for ALL relations as one MXU contraction:
        # [R*Npad, Npad] @ [Npad, Hpad] -> relation blocks stacked on sublanes
        agg = jnp.dot(a_mat, xm, preferred_element_type=f32).astype(md)
        # per-relation transform; static sublane-aligned slices (no restack)
        for r in range(num_relations):
            agg_r = agg[r * npad:(r + 1) * npad, :]
            h = h + jnp.dot(agg_r, wrel_ref[r], preferred_element_type=f32)
        # ELU (alpha=1); clamp the exp argument so the unselected branch never
        # produces inf (expm1-equivalent up to f32 rounding near 0)
        h = jnp.where(h > 0, h, jnp.exp(jnp.minimum(h, 0.0)) - 1.0)
        # LayerNorm over the first `hidden` lanes (eps=1e-5, biased variance);
        # padded lanes forced back to 0 via the mask / zero-padded gamma+beta.
        hm = h * mask
        mean = jnp.sum(hm, axis=-1, keepdims=True) * inv_h
        diff = (h - mean) * mask
        var = jnp.sum(diff * diff, axis=-1, keepdims=True) * inv_h
        x = diff * lax.rsqrt(var + 1e-5) * gamma + beta
        # TODO(synk): dropout is omitted (inference-mode identity).

    # --- global mean pool over operator nodes + both heads (packed) ---
    emb = jnp.dot(p_ref[...], x.astype(md), preferred_element_type=f32)
    o_ref[...] = (jnp.dot(emb.astype(md), whead_ref[...],
                          preferred_element_type=f32) + bhead_ref[...])


# ---------------------------------------------------------------------------
# Wrapper: pack / pad parameters & graph, call the single fused kernel
# ---------------------------------------------------------------------------
def hetero_graph_rgcn_forward(params, x_dict, edge_index_dict, batch_operator,
                              num_batches, metadata, edge_type_mapping,
                              num_layers, hidden, out_channels,
                              matmul_dtype=jnp.float32):
    # matmul_dtype=jnp.bfloat16 is recommended on v6e/v7x for large graphs
    # (f32 accumulation is kept via preferred_element_type); default f32 keeps
    # exact parity with the PyTorch module at this toy size.
    node_types = metadata[0]
    counts = {nt: x_dict[nt].shape[0] for nt in node_types}
    feat_dims = {nt: x_dict[nt].shape[1] for nt in node_types}
    num_relations = len(edge_type_mapping)
    T = len(node_types)

    offsets = {}
    off = 0
    for nt in node_types:
        offsets[nt] = off
        off += counts[nt]
    N = off
    NPAD = _round_up(max(N, 8), 8)

    # ---- packed encoder input: block-diagonal features + one-hot bias cols ----
    sum_f = sum(feat_dims[nt] for nt in node_types)
    FPAD = _round_up(sum_f + T, 128)
    xin = jnp.zeros((NPAD, FPAD), jnp.float32)
    fcol = 0
    for ti, nt in enumerate(node_types):
        c, f, o = counts[nt], feat_dims[nt], offsets[nt]
        xin = xin.at[o:o + c, fcol:fcol + f].set(x_dict[nt].astype(jnp.float32))
        xin = xin.at[o:o + c, sum_f + ti].set(1.0)  # bias indicator column
        fcol += f

    # ---- packed (pre-transposed) encoder weights: [FPAD, HPAD] ----
    enc_params = {'operator': ('w_op', 'b_op'),
                  'table': ('w_tab', 'b_tab'),
                  'column': ('w_col', 'b_col')}
    w_enc = jnp.zeros((FPAD, HPAD), jnp.float32)
    fcol = 0
    for ti, nt in enumerate(node_types):
        wk, bk = enc_params[nt]
        w, b = params[wk], params[bk]          # PyTorch layout: w is [out, in]
        f = w.shape[1]
        w_enc = w_enc.at[fcol:fcol + f, :hidden].set(w.T)
        w_enc = w_enc.at[sum_f + ti, :hidden].set(b)
        fcol += f

    # ---- dense normalized adjacency, relation blocks stacked on rows ----
    # TODO(synk): for large N, tile A with a grid / keep it in HBM (pl.ANY) with
    # scalar-prefetched edge lists instead of a whole-array VMEM input.
    A = jnp.zeros((num_relations, NPAD, NPAD), jnp.float32)
    for etype, eindex in edge_index_dict.items():
        rel = edge_type_mapping[etype]
        src_t, _, dst_t = etype
        src = eindex[0] + offsets[src_t]
        dst = eindex[1] + offsets[dst_t]
        A = A.at[rel, dst, src].add(1.0)
    deg = A.sum(axis=2, keepdims=True)
    A = jnp.where(deg > 0, A / deg, 0.0)        # mean aggregation per relation
    A_vstack = A.reshape(num_relations * NPAD, NPAD)

    # ---- relation weights, zero-padded to [R, HPAD, HPAD] (right-multiply) ----
    w_rel = params['w_rel']                      # [R, hidden, hidden]
    w_rel_pad = jnp.zeros((num_relations, HPAD, HPAD), jnp.float32)
    w_rel_pad = w_rel_pad.at[:, :hidden, :hidden].set(w_rel)

    w_root = jnp.zeros((HPAD, HPAD), jnp.float32).at[:hidden, :hidden].set(
        params['w_root'])
    b_conv = jnp.zeros((1, HPAD), jnp.float32).at[0, :hidden].set(params['b_conv'])
    gamma = jnp.zeros((1, HPAD), jnp.float32).at[0, :hidden].set(params['ln_gamma'])
    beta = jnp.zeros((1, HPAD), jnp.float32).at[0, :hidden].set(params['ln_beta'])

    # ---- global mean-pool matrix over operator nodes: [BPAD, NPAD] ----
    BPAD = _round_up(max(num_batches, 8), 8)
    n_op = counts['operator']
    op_off = offsets['operator']
    P = jnp.zeros((BPAD, NPAD), jnp.float32)
    P = P.at[batch_operator, op_off + jnp.arange(n_op)].add(1.0)
    cnt = P.sum(axis=1, keepdims=True)
    P = jnp.where(cnt > 0, P / cnt, 0.0)

    # ---- both output heads packed into one pre-transposed weight slab ----
    w_head = jnp.zeros((HPAD, OUTPAD), jnp.float32)
    w_head = w_head.at[:hidden, :out_channels].set(params['w_mem'].T)
    w_head = w_head.at[:hidden, out_channels:2 * out_channels].set(
        params['w_time'].T)
    b_head = jnp.zeros((1, OUTPAD), jnp.float32)
    b_head = b_head.at[0, :out_channels].set(params['b_mem'])
    b_head = b_head.at[0, out_channels:2 * out_channels].set(params['b_time'])

    md = matmul_dtype
    out = pl.pallas_call(
        partial(_fused_kernel, num_layers, num_relations, hidden, HPAD, NPAD),
        out_shape=jax.ShapeDtypeStruct((BPAD, OUTPAD), jnp.float32),
        in_specs=[_vmem_spec()] * 11,
        out_specs=_vmem_spec(),
        compiler_params=pltpu.CompilerParams(vmem_limit_bytes=64 * 1024 * 1024),
    )(xin.astype(md), A_vstack.astype(md), w_enc.astype(md),
      w_rel_pad.astype(md), w_root.astype(md), b_conv, gamma, beta,
      P.astype(md), w_head.astype(md), b_head)

    mem_pred = out[:num_batches, :out_channels]
    time_pred = out[:num_batches, out_channels:2 * out_channels]
    return jnp.squeeze(mem_pred), jnp.squeeze(time_pred)


# ---------------------------------------------------------------------------
# Pure-JAX reference (mirrors the PyTorch module) for a correctness check
# ---------------------------------------------------------------------------
def _reference(params, x_dict, edge_index_dict, batch_operator, num_batches,
               metadata, edge_type_mapping, num_layers, hidden, out_channels):
    node_types = metadata[0]
    enc = {'operator': ('w_op', 'b_op'), 'table': ('w_tab', 'b_tab'),
           'column': ('w_col', 'b_col')}
    xs, offsets, off = [], {}, 0
    for nt in node_types:
        offsets[nt] = off
        off += x_dict[nt].shape[0]
        wk, bk = enc[nt]
        xs.append(x_dict[nt] @ params[wk].T + params[bk])
    x = jnp.concatenate(xs, axis=0)
    N = x.shape[0]
    R = len(edge_type_mapping)
    A = jnp.zeros((R, N, N), jnp.float32)
    for etype, eindex in edge_index_dict.items():
        rel = edge_type_mapping[etype]
        s, _, d = etype
        A = A.at[rel, eindex[1] + offsets[d], eindex[0] + offsets[s]].add(1.0)
    deg = A.sum(axis=2, keepdims=True)
    A = jnp.where(deg > 0, A / deg, 0.0)
    for _ in range(num_layers):
        h = x @ params['w_root'] + params['b_conv']
        for r in range(R):
            h = h + (A[r] @ x) @ params['w_rel'][r]
        h = jnp.where(h > 0, h, jnp.expm1(jnp.minimum(h, 0.0)))   # ELU
        mean = h.mean(-1, keepdims=True)
        var = ((h - mean) ** 2).mean(-1, keepdims=True)
        x = (h - mean) / jnp.sqrt(var + 1e-5) * params['ln_gamma'] + params['ln_beta']
    n_op = x_dict['operator'].shape[0]
    opf = x[offsets['operator']:offsets['operator'] + n_op]
    sel = jnp.zeros((num_batches, n_op), jnp.float32)
    sel = sel.at[batch_operator, jnp.arange(n_op)].add(1.0)
    cnt = sel.sum(axis=1, keepdims=True)
    emb = jnp.where(cnt > 0, (sel @ opf) / cnt, 0.0)
    mem = emb @ params['w_mem'].T + params['b_mem']
    tim = emb @ params['w_time'].T + params['b_time']
    return jnp.squeeze(mem), jnp.squeeze(tim)


# ---------------------------------------------------------------------------
if __name__ == "__main__":
    key = jax.random.PRNGKey(0)

    hidden = 32
    out_channels = 1
    num_layers = 2
    num_operator_features = 8
    num_table_features = 5
    num_column_features = 6

    n_op, n_tab, n_col = 10, 3, 7
    batch_size = 2

    metadata = (['operator', 'table', 'column'],
                [('operator', 'calledby', 'operator'),
                 ('table', 'scannedby', 'operator'),
                 ('column', 'outputby', 'operator'),
                 ('table', 'selfloop', 'table'),
                 ('column', 'selfloop', 'column')])
    edge_type_mapping = {e: i for i, e in enumerate(metadata[1])}
    num_relations = len(edge_type_mapping)

    keys = jax.random.split(key, 24)

    # ---- deterministic parameters (synthetic init, PyTorch shapes) ----
    params = {
        'w_op': 0.1 * jax.random.normal(keys[0], (hidden, num_operator_features), jnp.float32),
        'b_op': 0.1 * jax.random.normal(keys[1], (hidden,), jnp.float32),
        'w_tab': 0.1 * jax.random.normal(keys[2], (hidden, num_table_features), jnp.float32),
        'b_tab': 0.1 * jax.random.normal(keys[3], (hidden,), jnp.float32),
        'w_col': 0.1 * jax.random.normal(keys[4], (hidden, num_column_features), jnp.float32),
        'b_col': 0.1 * jax.random.normal(keys[5], (hidden,), jnp.float32),
        # RGCN: per-relation weights (applied as X @ W_r) + root weight + bias
        'w_rel': 0.1 * jax.random.normal(keys[6], (num_relations, hidden, hidden), jnp.float32),
        'w_root': 0.1 * jax.random.normal(keys[7], (hidden, hidden), jnp.float32),
        'b_conv': 0.1 * jax.random.normal(keys[8], (hidden,), jnp.float32),
        # LayerNorm affine (PyTorch init: ones / zeros)
        'ln_gamma': jnp.ones((hidden,), jnp.float32),
        'ln_beta': jnp.zeros((hidden,), jnp.float32),
        'w_mem': 0.1 * jax.random.normal(keys[9], (out_channels, hidden), jnp.float32),
        'b_mem': 0.1 * jax.random.normal(keys[10], (out_channels,), jnp.float32),
        'w_time': 0.1 * jax.random.normal(keys[11], (out_channels, hidden), jnp.float32),
        'b_time': 0.1 * jax.random.normal(keys[12], (out_channels,), jnp.float32),
    }

    # ---- deterministic inputs ----
    x_dict = {
        'operator': jax.random.normal(keys[13], (n_op, num_operator_features), jnp.float32),
        'table': jax.random.normal(keys[14], (n_tab, num_table_features), jnp.float32),
        'column': jax.random.normal(keys[15], (n_col, num_column_features), jnp.float32),
    }

    edge_index_dict = {
        ('operator', 'calledby', 'operator'): jnp.stack([
            jax.random.randint(keys[16], (15,), 0, n_op),
            jax.random.randint(keys[17], (15,), 0, n_op)]).astype(jnp.int32),
        ('table', 'scannedby', 'operator'): jnp.stack([
            jax.random.randint(keys[18], (6,), 0, n_tab),
            jax.random.randint(keys[19], (6,), 0, n_op)]).astype(jnp.int32),
        ('column', 'outputby', 'operator'): jnp.stack([
            jax.random.randint(keys[20], (8,), 0, n_col),
            jax.random.randint(keys[21], (8,), 0, n_op)]).astype(jnp.int32),
        ('table', 'selfloop', 'table'): jnp.stack([
            jnp.arange(n_tab, dtype=jnp.int32), jnp.arange(n_tab, dtype=jnp.int32)]),
        ('column', 'selfloop', 'column'): jnp.stack([
            jnp.arange(n_col, dtype=jnp.int32), jnp.arange(n_col, dtype=jnp.int32)]),
    }

    batch_operator = jnp.array([0, 0, 0, 0, 0, 1, 1, 1, 1, 1], dtype=jnp.int32)

    mem_pred, time_pred = hetero_graph_rgcn_forward(
        params, x_dict, edge_index_dict, batch_operator, batch_size,
        metadata, edge_type_mapping, num_layers, hidden, out_channels,
        matmul_dtype=jnp.float32)  # use jnp.bfloat16 on v6e/v7x at scale
    jax.block_until_ready((mem_pred, time_pred))

    assert mem_pred.shape == (batch_size,) and time_pred.shape == (batch_size,)

    # correctness check against the pure-JAX reference
    with jax.default_matmul_precision("highest"):
        mem_ref, time_ref = _reference(
            params, x_dict, edge_index_dict, batch_operator, batch_size,
            metadata, edge_type_mapping, num_layers, hidden, out_channels)
    jax.block_until_ready((mem_ref, time_ref))
    assert bool(jnp.allclose(mem_pred, mem_ref, rtol=5e-3, atol=5e-3)), (mem_pred, mem_ref)
    assert bool(jnp.allclose(time_pred, time_ref, rtol=5e-3, atol=5e-3)), (time_pred, time_ref)

    print("KERNEL_OK")
</pallas_src>

<mosaic_0001>
module attributes {stable_mosaic.version = 11 : i64} {
  func.func @_fused_kernel(%arg0: memref<24x128xf32, #tpu.memory_space<vmem>>, %arg1: memref<120x24xf32, #tpu.memory_space<vmem>>, %arg2: memref<128x128xf32, #tpu.memory_space<vmem>>, %arg3: memref<5x128x128xf32, #tpu.memory_space<vmem>>, %arg4: memref<128x128xf32, #tpu.memory_space<vmem>>, %arg5: memref<1x128xf32, #tpu.memory_space<vmem>>, %arg6: memref<1x128xf32, #tpu.memory_space<vmem>>, %arg7: memref<1x128xf32, #tpu.memory_space<vmem>>, %arg8: memref<8x24xf32, #tpu.memory_space<vmem>>, %arg9: memref<128x128xf32, #tpu.memory_space<vmem>>, %arg10: memref<1x128xf32, #tpu.memory_space<vmem>>, %arg11: memref<8x128xf32, #tpu.memory_space<vmem>>) attributes {dimension_semantics = [], scalar_prefetch = 0 : i64, scratch_operands = 0 : i64, tpu.core_type = #tpu.core_type<tc>} {
    %c0 = arith.constant 0 : index
    %c0_0 = arith.constant 0 : index
    %0 = vector.load %arg0[%c0, %c0_0] : memref<24x128xf32, #tpu.memory_space<vmem>>, vector<24x128xf32>
    %c0_1 = arith.constant 0 : index
    %c0_2 = arith.constant 0 : index
    %1 = vector.load %arg2[%c0_1, %c0_2] : memref<128x128xf32, #tpu.memory_space<vmem>>, vector<128x128xf32>
    %cst = arith.constant dense<0.000000e+00> : vector<24x128xf32>
    %2 = tpu.matmul %0, %1, %cst {dimension_numbers = #tpu.dot_dimension_numbers<[1], [0], [0], [1], [0, 0, 1, 1], [], []>} : vector<24x128xf32>, vector<128x128xf32>, vector<24x128xf32> -> vector<24x128xf32>
    %3 = tpu.iota {dimensions = array<i32: 1>} : vector<1x128xi32>
    %c32_i32 = arith.constant 32 : i32
    %4 = vector.broadcast %c32_i32 : i32 to vector<1x128xi32>
    %5 = arith.cmpi slt, %3, %4 : vector<1x128xi32>
    %6 = arith.extui %5 : vector<1x128xi1> to vector<1x128xi32>
    %7 = arith.sitofp %6 : vector<1x128xi32> to vector<1x128xf32>
    %c0_3 = arith.constant 0 : index
    %c0_4 = arith.constant 0 : index
    %8 = vector.load %arg6[%c0_3, %c0_4] : memref<1x128xf32, #tpu.memory_space<vmem>>, vector<1x128xf32>
    %c0_5 = arith.constant 0 : index
    %c0_6 = arith.constant 0 : index
    %9 = vector.load %arg7[%c0_5, %c0_6] : memref<1x128xf32, #tpu.memory_space<vmem>>, vector<1x128xf32>
    %c0_7 = arith.constant 0 : index
    %c0_8 = arith.constant 0 : index
    %10 = vector.load %arg5[%c0_7, %c0_8] : memref<1x128xf32, #tpu.memory_space<vmem>>, vector<1x128xf32>
    %c0_9 = arith.constant 0 : index
    %c0_10 = arith.constant 0 : index
    %11 = vector.load %arg1[%c0_9, %c0_10] : memref<120x24xf32, #tpu.memory_space<vmem>>, vector<120x24xf32>
    %c0_11 = arith.constant 0 : index
    %c0_12 = arith.constant 0 : index
    %12 = vector.load %arg4[%c0_11, %c0_12] : memref<128x128xf32, #tpu.memory_space<vmem>>, vector<128x128xf32>
    %cst_13 = arith.constant dense<0.000000e+00> : vector<24x128xf32>
    %13 = tpu.matmul %2, %12, %cst_13 {dimension_numbers = #tpu.dot_dimension_numbers<[1], [0], [0], [1], [0, 0, 1, 1], [], []>} : vector<24x128xf32>, vector<128x128xf32>, vector<24x128xf32> -> vector<24x128xf32>
    %14 = vector.broadcast %10 : vector<1x128xf32> to vector<24x128xf32>
    %15 = arith.addf %13, %14 : vector<24x128xf32>
    %cst_14 = arith.constant dense<0.000000e+00> : vector<120x128xf32>
    %16 = tpu.matmul %11, %2, %cst_14 {dimension_numbers = #tpu.dot_dimension_numbers<[1], [0], [0], [1], [0, 0, 1, 1], [], []>} : vector<120x24xf32>, vector<24x128xf32>, vector<120x128xf32> -> vector<120x128xf32>
    %17 = vector.extract_strided_slice %16 {offsets = [0, 0], sizes = [24, 128], strides = [1, 1]} : vector<120x128xf32> to vector<24x128xf32>
    %c0_15 = arith.constant 0 : index
    %c0_16 = arith.constant 0 : index
    %c0_17 = arith.constant 0 : index
    %18 = vector.load %arg3[%c0_15, %c0_16, %c0_17] : memref<5x128x128xf32, #tpu.memory_space<vmem>>, vector<1x128x128xf32>
    %19 = vector.shape_cast %18 : vector<1x128x128xf32> to vector<128x128xf32>
    %cst_18 = arith.constant dense<0.000000e+00> : vector<24x128xf32>
    %20 = tpu.matmul %17, %19, %cst_18 {dimension_numbers = #tpu.dot_dimension_numbers<[1], [0], [0], [1], [0, 0, 1, 1], [], []>} : vector<24x128xf32>, vector<128x128xf32>, vector<24x128xf32> -> vector<24x128xf32>
    %21 = arith.addf %15, %20 : vector<24x128xf32>
    %22 = vector.extract_strided_slice %16 {offsets = [24, 0], sizes = [24, 128], strides = [1, 1]} : vector<120x128xf32> to vector<24x128xf32>
    %c1 = arith.constant 1 : index
    %c0_19 = arith.constant 0 : index
    %c0_20 = arith.constant 0 : index
    %23 = vector.load %arg3[%c1, %c0_19, %c0_20] : memref<5x128x128xf32, #tpu.memory_space<vmem>>, vector<1x128x128xf32>
    %24 = vector.shape_cast %23 : vector<1x128x128xf32> to vector<128x128xf32>
    %cst_21 = arith.constant dense<0.000000e+00> : vector<24x128xf32>
    %25 = tpu.matmul %22, %24, %cst_21 {dimension_numbers = #tpu.dot_dimension_numbers<[1], [0], [0], [1], [0, 0, 1, 1], [], []>} : vector<24x128xf32>, vector<128x128xf32>, vector<24x128xf32> -> vector<24x128xf32>
    %26 = arith.addf %21, %25 : vector<24x128xf32>
    %27 = vector.extract_strided_slice %16 {offsets = [48, 0], sizes = [24, 128], strides = [1, 1]} : vector<120x128xf32> to vector<24x128xf32>
    %c2 = arith.constant 2 : index
    %c0_22 = arith.constant 0 : index
    %c0_23 = arith.constant 0 : index
    %28 = vector.load %arg3[%c2, %c0_22, %c0_23] : memref<5x128x128xf32, #tpu.memory_space<vmem>>, vector<1x128x128xf32>
    %29 = vector.shape_cast %28 : vector<1x128x128xf32> to vector<128x128xf32>
    %cst_24 = arith.constant dense<0.000000e+00> : vector<24x128xf32>
    %30 = tpu.matmul %27, %29, %cst_24 {dimension_numbers = #tpu.dot_dimension_numbers<[1], [0], [0], [1], [0, 0, 1, 1], [], []>} : vector<24x128xf32>, vector<128x128xf32>, vector<24x128xf32> -> vector<24x128xf32>
    %31 = arith.addf %26, %30 : vector<24x128xf32>
    %32 = vector.extract_strided_slice %16 {offsets = [72, 0], sizes = [24, 128], strides = [1, 1]} : vector<120x128xf32> to vector<24x128xf32>
    %c3 = arith.constant 3 : index
    %c0_25 = arith.constant 0 : index
    %c0_26 = arith.constant 0 : index
    %33 = vector.load %arg3[%c3, %c0_25, %c0_26] : memref<5x128x128xf32, #tpu.memory_space<vmem>>, vector<1x128x128xf32>
    %34 = vector.shape_cast %33 : vector<1x128x128xf32> to vector<128x128xf32>
    %cst_27 = arith.constant dense<0.000000e+00> : vector<24x128xf32>
    %35 = tpu.matmul %32, %34, %cst_27 {dimension_numbers = #tpu.dot_dimension_numbers<[1], [0], [0], [1], [0, 0, 1, 1], [], []>} : vector<24x128xf32>, vector<128x128xf32>, vector<24x128xf32> -> vector<24x128xf32>
    %36 = arith.addf %31, %35 : vector<24x128xf32>
    %37 = vector.extract_strided_slice %16 {offsets = [96, 0], sizes = [24, 128], strides = [1, 1]} : vector<120x128xf32> to vector<24x128xf32>
    %c4 = arith.constant 4 : index
    %c0_28 = arith.constant 0 : index
    %c0_29 = arith.constant 0 : index
    %38 = vector.load %arg3[%c4, %c0_28, %c0_29] : memref<5x128x128xf32, #tpu.memory_space<vmem>>, vector<1x128x128xf32>
    %39 = vector.shape_cast %38 : vector<1x128x128xf32> to vector<128x128xf32>
    %cst_30 = arith.constant dense<0.000000e+00> : vector<24x128xf32>
    %40 = tpu.matmul %37, %39, %cst_30 {dimension_numbers = #tpu.dot_dimension_numbers<[1], [0], [0], [1], [0, 0, 1, 1], [], []>} : vector<24x128xf32>, vector<128x128xf32>, vector<24x128xf32> -> vector<24x128xf32>
    %41 = arith.addf %36, %40 : vector<24x128xf32>
    %cst_31 = arith.constant 0.000000e+00 : f32
    %42 = vector.broadcast %cst_31 : f32 to vector<24x128xf32>
    %43 = arith.cmpf ogt, %41, %42 : vector<24x128xf32>
    %cst_32 = arith.constant 0.000000e+00 : f32
    %44 = vector.broadcast %cst_32 : f32 to vector<24x128xf32>
    %45 = arith.minimumf %41, %44 : vector<24x128xf32>
    %46 = math.exp %45 : vector<24x128xf32>
    %cst_33 = arith.constant 1.000000e+00 : f32
    %47 = vector.broadcast %cst_33 : f32 to vector<24x128xf32>
    %48 = arith.subf %46, %47 : vector<24x128xf32>
    %49 = arith.select %43, %41, %48 : vector<24x128xi1>, vector<24x128xf32>
    %50 = vector.broadcast %7 : vector<1x128xf32> to vector<24x128xf32>
    %51 = arith.mulf %49, %50 : vector<24x128xf32>
    %cst_34 = arith.constant dense<0.000000e+00> : vector<24xf32>
    %52 = vector.multi_reduction <add>, %51, %cst_34 [1] : vector<24x128xf32> to vector<24xf32>
    %53 = vector.shape_cast %52 : vector<24xf32> to vector<24x1xf32>
    %cst_35 = arith.constant 3.125000e-02 : f32
    %54 = vector.broadcast %cst_35 : f32 to vector<24x1xf32>
    %55 = arith.mulf %53, %54 : vector<24x1xf32>
    %56 = vector.broadcast %55 : vector<24x1xf32> to vector<24x128xf32>
    %57 = arith.subf %49, %56 : vector<24x128xf32>
    %58 = vector.broadcast %7 : vector<1x128xf32> to vector<24x128xf32>
    %59 = arith.mulf %57, %58 : vector<24x128xf32>
    %60 = arith.mulf %59, %59 : vector<24x128xf32>
    %cst_36 = arith.constant dense<0.000000e+00> : vector<24xf32>
    %61 = vector.multi_reduction <add>, %60, %cst_36 [1] : vector<24x128xf32> to vector<24xf32>
    %62 = vector.shape_cast %61 : vector<24xf32> to vector<24x1xf32>
    %cst_37 = arith.constant 3.125000e-02 : f32
    %63 = vector.broadcast %cst_37 : f32 to vector<24x1xf32>
    %64 = arith.mulf %62, %63 : vector<24x1xf32>
    %cst_38 = arith.constant 9.99999974E-6 : f32
    %65 = vector.broadcast %cst_38 : f32 to vector<24x1xf32>
    %66 = arith.addf %64, %65 : vector<24x1xf32>
    %67 = math.rsqrt %66 : vector<24x1xf32>
    %68 = vector.broadcast %67 : vector<24x1xf32> to vector<24x128xf32>
    %69 = arith.mulf %59, %68 : vector<24x128xf32>
    %70 = vector.broadcast %8 : vector<1x128xf32> to vector<24x128xf32>
    %71 = arith.mulf %69, %70 : vector<24x128xf32>
    %72 = vector.broadcast %9 : vector<1x128xf32> to vector<24x128xf32>
    %73 = arith.addf %71, %72 : vector<24x128xf32>
    %c0_39 = arith.constant 0 : index
    %c0_40 = arith.constant 0 : index
    %74 = vector.load %arg4[%c0_39, %c0_40] : memref<128x128xf32, #tpu.memory_space<vmem>>, vector<128x128xf32>
    %cst_41 = arith.constant dense<0.000000e+00> : vector<24x128xf32>
    %75 = tpu.matmul %73, %74, %cst_41 {dimension_numbers = #tpu.dot_dimension_numbers<[1], [0], [0], [1], [0, 0, 1, 1], [], []>} : vector<24x128xf32>, vector<128x128xf32>, vector<24x128xf32> -> vector<24x128xf32>
    %76 = vector.broadcast %10 : vector<1x128xf32> to vector<24x128xf32>
    %77 = arith.addf %75, %76 : vector<24x128xf32>
    %cst_42 = arith.constant dense<0.000000e+00> : vector<120x128xf32>
    %78 = tpu.matmul %11, %73, %cst_42 {dimension_numbers = #tpu.dot_dimension_numbers<[1], [0], [0], [1], [0, 0, 1, 1], [], []>} : vector<120x24xf32>, vector<24x128xf32>, vector<120x128xf32> -> vector<120x128xf32>
    %79 = vector.extract_strided_slice %78 {offsets = [0, 0], sizes = [24, 128], strides = [1, 1]} : vector<120x128xf32> to vector<24x128xf32>
    %c0_43 = arith.constant 0 : index
    %c0_44 = arith.constant 0 : index
    %c0_45 = arith.constant 0 : index
    %80 = vector.load %arg3[%c0_43, %c0_44, %c0_45] : memref<5x128x128xf32, #tpu.memory_space<vmem>>, vector<1x128x128xf32>
    %81 = vector.shape_cast %80 : vector<1x128x128xf32> to vector<128x128xf32>
    %cst_46 = arith.constant dense<0.000000e+00> : vector<24x128xf32>
    %82 = tpu.matmul %79, %81, %cst_46 {dimension_numbers = #tpu.dot_dimension_numbers<[1], [0], [0], [1], [0, 0, 1, 1], [], []>} : vector<24x128xf32>, vector<128x128xf32>, vector<24x128xf32> -> vector<24x128xf32>
    %83 = arith.addf %77, %82 : vector<24x128xf32>
    %84 = vector.extract_strided_slice %78 {offsets = [24, 0], sizes = [24, 128], strides = [1, 1]} : vector<120x128xf32> to vector<24x128xf32>
    %c1_47 = arith.constant 1 : index
    %c0_48 = arith.constant 0 : index
    %c0_49 = arith.constant 0 : index
    %85 = vector.load %arg3[%c1_47, %c0_48, %c0_49] : memref<5x128x128xf32, #tpu.memory_space<vmem>>, vector<1x128x128xf32>
    %86 = vector.shape_cast %85 : vector<1x128x128xf32> to vector<128x128xf32>
    %cst_50 = arith.constant dense<0.000000e+00> : vector<24x128xf32>
    %87 = tpu.matmul %84, %86, %cst_50 {dimension_numbers = #tpu.dot_dimension_numbers<[1], [0], [0], [1], [0, 0, 1, 1], [], []>} : vector<24x128xf32>, vector<128x128xf32>, vector<24x128xf32> -> vector<24x128xf32>
    %88 = arith.addf %83, %87 : vector<24x128xf32>
    %89 = vector.extract_strided_slice %78 {offsets = [48, 0], sizes = [24, 128], strides = [1, 1]} : vector<120x128xf32> to vector<24x128xf32>
    %c2_51 = arith.constant 2 : index
    %c0_52 = arith.constant 0 : index
    %c0_53 = arith.constant 0 : index
    %90 = vector.load %arg3[%c2_51, %c0_52, %c0_53] : memref<5x128x128xf32, #tpu.memory_space<vmem>>, vector<1x128x128xf32>
    %91 = vector.shape_cast %90 : vector<1x128x128xf32> to vector<128x128xf32>
    %cst_54 = arith.constant dense<0.000000e+00> : vector<24x128xf32>
    %92 = tpu.matmul %89, %91, %cst_54 {dimension_numbers = #tpu.dot_dimension_numbers<[1], [0], [0], [1], [0, 0, 1, 1], [], []>} : vector<24x128xf32>, vector<128x128xf32>, vector<24x128xf32> -> vector<24x128xf32>
    %93 = arith.addf %88, %92 : vector<24x128xf32>
    %94 = vector.extract_strided_slice %78 {offsets = [72, 0], sizes = [24, 128], strides = [1, 1]} : vector<120x128xf32> to vector<24x128xf32>
    %c3_55 = arith.constant 3 : index
    %c0_56 = arith.constant 0 : index
    %c0_57 = arith.constant 0 : index
    %95 = vector.load %arg3[%c3_55, %c0_56, %c0_57] : memref<5x128x128xf32, #tpu.memory_space<vmem>>, vector<1x128x128xf32>
    %96 = vector.shape_cast %95 : vector<1x128x128xf32> to vector<128x128xf32>
    %cst_58 = arith.constant dense<0.000000e+00> : vector<24x128xf32>
    %97 = tpu.matmul %94, %96, %cst_58 {dimension_numbers = #tpu.dot_dimension_numbers<[1], [0], [0], [1], [0, 0, 1, 1], [], []>} : vector<24x128xf32>, vector<128x128xf32>, vector<24x128xf32> -> vector<24x128xf32>
    %98 = arith.addf %93, %97 : vector<24x128xf32>
    %99 = vector.extract_strided_slice %78 {offsets = [96, 0], sizes = [24, 128], strides = [1, 1]} : vector<120x128xf32> to vector<24x128xf32>
    %c4_59 = arith.constant 4 : index
    %c0_60 = arith.constant 0 : index
    %c0_61 = arith.constant 0 : index
    %100 = vector.load %arg3[%c4_59, %c0_60, %c0_61] : memref<5x128x128xf32, #tpu.memory_space<vmem>>, vector<1x128x128xf32>
    %101 = vector.shape_cast %100 : vector<1x128x128xf32> to vector<128x128xf32>
    %cst_62 = arith.constant dense<0.000000e+00> : vector<24x128xf32>
    %102 = tpu.matmul %99, %101, %cst_62 {dimension_numbers = #tpu.dot_dimension_numbers<[1], [0], [0], [1], [0, 0, 1, 1], [], []>} : vector<24x128xf32>, vector<128x128xf32>, vector<24x128xf32> -> vector<24x128xf32>
    %103 = arith.addf %98, %102 : vector<24x128xf32>
    %cst_63 = arith.constant 0.000000e+00 : f32
    %104 = vector.broadcast %cst_63 : f32 to vector<24x128xf32>
    %105 = arith.cmpf ogt, %103, %104 : vector<24x128xf32>
    %cst_64 = arith.constant 0.000000e+00 : f32
    %106 = vector.broadcast %cst_64 : f32 to vector<24x128xf32>
    %107 = arith.minimumf %103, %106 : vector<24x128xf32>
    %108 = math.exp %107 : vector<24x128xf32>
    %cst_65 = arith.constant 1.000000e+00 : f32
    %109 = vector.broadcast %cst_65 : f32 to vector<24x128xf32>
    %110 = arith.subf %108, %109 : vector<24x128xf32>
    %111 = arith.select %105, %103, %110 : vector<24x128xi1>, vector<24x128xf32>
    %112 = vector.broadcast %7 : vector<1x128xf32> to vector<24x128xf32>
    %113 = arith.mulf %111, %112 : vector<24x128xf32>
    %cst_66 = arith.constant dense<0.000000e+00> : vector<24xf32>
    %114 = vector.multi_reduction <add>, %113, %cst_66 [1] : vector<24x128xf32> to vector<24xf32>
    %115 = vector.shape_cast %114 : vector<24xf32> to vector<24x1xf32>
    %cst_67 = arith.constant 3.125000e-02 : f32
    %116 = vector.broadcast %cst_67 : f32 to vector<24x1xf32>
    %117 = arith.mulf %115, %116 : vector<24x1xf32>
    %118 = vector.broadcast %117 : vector<24x1xf32> to vector<24x128xf32>
    %119 = arith.subf %111, %118 : vector<24x128xf32>
    %120 = vector.broadcast %7 : vector<1x128xf32> to vector<24x128xf32>
    %121 = arith.mulf %119, %120 : vector<24x128xf32>
    %122 = arith.mulf %121, %121 : vector<24x128xf32>
    %cst_68 = arith.constant dense<0.000000e+00> : vector<24xf32>
    %123 = vector.multi_reduction <add>, %122, %cst_68 [1] : vector<24x128xf32> to vector<24xf32>
    %124 = vector.shape_cast %123 : vector<24xf32> to vector<24x1xf32>
    %cst_69 = arith.constant 3.125000e-02 : f32
    %125 = vector.broadcast %cst_69 : f32 to vector<24x1xf32>
    %126 = arith.mulf %124, %125 : vector<24x1xf32>
    %cst_70 = arith.constant 9.99999974E-6 : f32
    %127 = vector.broadcast %cst_70 : f32 to vector<24x1xf32>
    %128 = arith.addf %126, %127 : vector<24x1xf32>
    %129 = math.rsqrt %128 : vector<24x1xf32>
    %130 = vector.broadcast %129 : vector<24x1xf32> to vector<24x128xf32>
    %131 = arith.mulf %121, %130 : vector<24x128xf32>
    %132 = vector.broadcast %8 : vector<1x128xf32> to vector<24x128xf32>
    %133 = arith.mulf %131, %132 : vector<24x128xf32>
    %134 = vector.broadcast %9 : vector<1x128xf32> to vector<24x128xf32>
    %135 = arith.addf %133, %134 : vector<24x128xf32>
    %c0_71 = arith.constant 0 : index
    %c0_72 = arith.constant 0 : index
    %136 = vector.load %arg8[%c0_71, %c0_72] : memref<8x24xf32, #tpu.memory_space<vmem>>, vector<8x24xf32>
    %cst_73 = arith.constant dense<0.000000e+00> : vector<8x128xf32>
    %137 = tpu.matmul %136, %135, %cst_73 {dimension_numbers = #tpu.dot_dimension_numbers<[1], [0], [0], [1], [0, 0, 1, 1], [], []>} : vector<8x24xf32>, vector<24x128xf32>, vector<8x128xf32> -> vector<8x128xf32>
    %c0_74 = arith.constant 0 : index
    %c0_75 = arith.constant 0 : index
    %138 = vector.load %arg9[%c0_74, %c0_75] : memref<128x128xf32, #tpu.memory_space<vmem>>, vector<128x128xf32>
    %cst_76 = arith.constant dense<0.000000e+00> : vector<8x128xf32>
    %139 = tpu.matmul %137, %138, %cst_76 {dimension_numbers = #tpu.dot_dimension_numbers<[1], [0], [0], [1], [0, 0, 1, 1], [], []>} : vector<8x128xf32>, vector<128x128xf32>, vector<8x128xf32> -> vector<8x128xf32>
    %c0_77 = arith.constant 0 : index
    %c0_78 = arith.constant 0 : index
    %140 = vector.load %arg10[%c0_77, %c0_78] : memref<1x128xf32, #tpu.memory_space<vmem>>, vector<1x128xf32>
    %141 = vector.broadcast %140 : vector<1x128xf32> to vector<8x128xf32>
    %142 = arith.addf %139, %141 : vector<8x128xf32>
    %c0_79 = arith.constant 0 : index
    %c0_80 = arith.constant 0 : index
    %143 = vector.load %arg11[%c0_79, %c0_80] : memref<8x128xf32, #tpu.memory_space<vmem>>, vector<8x128xf32>
    tpu.vector_store %arg11[%c0_79, %c0_80], %142 {strides = array<i32>} : memref<8x128xf32, #tpu.memory_space<vmem>>, vector<8x128xf32>,
    return
  }
}

</mosaic_0001>

<llo_original>
// kernel: tpu_custom_call.1
$region0: #{tpu_custom_call.1}
  #allocation0 [shape = 'u32[]', space=smem, size = 0x4, offset = 0x4, fixed_abs, tag = 'smem constant byte address 0x4 - core index']
  #allocation1 [shape = 'u32[144,128]{1,0:T(1,128)}', space=vmem, size = 0x12000, scoped, tag = 'internal scratch']
  %s0 = inlined_call_operand.hbm [shape: f32[24,128], index: 0, kind: input, shape index: {}]
  %s1 = inlined_call_operand.vmem [shape: f32[120,24], index: 1, kind: input, shape index: {}]
  %s2 = inlined_call_operand.vmem [shape: f32[128,128], index: 2, kind: input, shape index: {}]
  %s3 = inlined_call_operand.hbm [shape: f32[5,128,128], index: 3, kind: input, shape index: {}]
  %s4 = inlined_call_operand.hbm [shape: f32[128,128], index: 4, kind: input, shape index: {}]
  %s5 = inlined_call_operand.vmem [shape: f32[1,128], index: 5, kind: input, shape index: {}]
  %s6 = inlined_call_operand.vmem [shape: f32[1,128], index: 6, kind: input, shape index: {}]
  %s7 = inlined_call_operand.vmem [shape: f32[1,128], index: 7, kind: input, shape index: {}]
  %s8 = inlined_call_operand.vmem [shape: f32[8,24], index: 8, kind: input, shape index: {}]
  %s9 = inlined_call_operand.hbm [shape: f32[128,128], index: 9, kind: input, shape index: {}]
  %s10 = inlined_call_operand.vmem [shape: f32[1,128], index: 10, kind: input, shape index: {}]
  %s11 = inlined_call_operand.hbm [shape: f32[8,128], index: 11, kind: output, shape index: {}]
  %s12 = sld [smem:[#allocation0]]
  $region70: #{tpu_custom_call.1} parent=0
    _
  %s14 = ssub.s32 1, %s12
  %s15 = scalar_select 0, %s14, %s12
  $region1: #{tpu_custom_call.1} parent=0
    #allocation2 [shape = 'u8[12288]{0}', space=vmem, size = 0x3000, scoped, tag = 'input window, operand 0, single buffered']
    #allocation3 [shape = 's32[1]{0}', space=sflag, size = 0x4, scoped, tag = 'scoped memory for tpu_custom_call.1']
    #allocation4 [shape = 's32[1]{0}', space=sflag, size = 0x4, scoped, tag = 'scoped memory for tpu_custom_call.1']
    #allocation5 [shape = 'u8[327680]{0}', space=vmem, size = 0x50000, scoped, tag = 'input window, operand 3, single buffered']
    #allocation6 [shape = 's32[1]{0}', space=sflag, size = 0x4, scoped, tag = 'scoped memory for tpu_custom_call.1']
    #allocation7 [shape = 'u8[65536]{0}', space=vmem, size = 0x10000, scoped, tag = 'input window, operand 4, single buffered']
    #allocation8 [shape = 'u8[65536]{0}', space=vmem, size = 0x10000, scoped, tag = 'input window, operand 9, single buffered']
    #allocation9 [shape = 's32[1]{0}', space=sflag, size = 0x4, scoped, tag = 'scoped memory for tpu_custom_call.1']
    #allocation10 [shape = 'u8[4096]{0}', space=vmem, size = 0x1000, scoped, tag = 'output window, operand 0, single buffered']
    %16 = vsyncpa [#allocation3], 0
    %17 = vsyncpa [#allocation6], 0
    %18 = vsyncpa [#allocation9], 0
    %19 = vsyncpa [#allocation4], 0
    // Predicated region
    $region2: #{tpu_custom_call.1} parent=1 // pred_check
      _
    $region3: #{tpu_custom_call.1} parent=1 // pred_check_branch
      %21 = sbr.rel (0) target = $region5
    $region4: #{tpu_custom_call.1} parent=1 // pred_region
      %s23 = ssub.s32 384, 384
      %24 = vsyncadd [#allocation3], %s23
      %s25 = sshll.u32 [#allocation2], 4
      %s26 = int_to_ptr.vmem [resolvable:$true] %s25
      %31 = dma.hbm_to_vmem [thread:$0]  %s0, 384, %s26, [#allocation3], 128, 128, 8
    $region5: #{tpu_custom_call.1} parent=1 // pred_fallthru
      _
    // Predicated region
    $region6: #{tpu_custom_call.1} parent=1 // pred_check
      _
    $region7: #{tpu_custom_call.1} parent=1 // pred_check_branch
      %33 = sbr.rel (0) target = $region9
    $region8: #{tpu_custom_call.1} parent=1 // pred_region
      _
    $region9: #{tpu_custom_call.1} parent=1 // pred_fallthru
      _
    // Predicated region
    $region10: #{tpu_custom_call.1} parent=1 // pred_check
      _
    $region11: #{tpu_custom_call.1} parent=1 // pred_check_branch
      %35 = sbr.rel (0) target = $region13
    $region12: #{tpu_custom_call.1} parent=1 // pred_region
      _
    $region13: #{tpu_custom_call.1} parent=1 // pred_fallthru
      _
    // Predicated region
    $region14: #{tpu_custom_call.1} parent=1 // pred_check
      _
    $region15: #{tpu_custom_call.1} parent=1 // pred_check_branch
      %37 = sbr.rel (0) target = $region17
    $region16: #{tpu_custom_call.1} parent=1 // pred_region
      %s39 = ssub.s32 10240, 10240
      %40 = vsyncadd [#allocation6], %s39
      %s41 = sshll.u32 [#allocation5], 4
      %s42 = int_to_ptr.vmem [resolvable:$true] %s41
      %47 = dma.hbm_to_vmem [thread:$0]  %s3, 10240, %s42, [#allocation6], 128, 128, 8
    $region17: #{tpu_custom_call.1} parent=1 // pred_fallthru
      _
    // Predicated region
    $region18: #{tpu_custom_call.1} parent=1 // pred_check
      _
    $region19: #{tpu_custom_call.1} parent=1 // pred_check_branch
      %49 = sbr.rel (0) target = $region21
    $region20: #{tpu_custom_call.1} parent=1 // pred_region
      %s51 = ssub.s32 2048, 2048
      %52 = vsyncadd [#allocation6], %s51
      %s53 = sshll.u32 [#allocation7], 4
      %s54 = int_to_ptr.vmem [resolvable:$true] %s53
      %59 = dma.hbm_to_vmem [thread:$0]  %s4, 2048, %s54, [#allocation6], 128, 128, 8
    $region21: #{tpu_custom_call.1} parent=1 // pred_fallthru
      _
    // Predicated region
    $region22: #{tpu_custom_call.1} parent=1 // pred_check
      _
    $region23: #{tpu_custom_call.1} parent=1 // pred_check_branch
      %61 = sbr.rel (0) target = $region25
    $region24: #{tpu_custom_call.1} parent=1 // pred_region
      _
    $region25: #{tpu_custom_call.1} parent=1 // pred_fallthru
      _
    // Predicated region
    $region26: #{tpu_custom_call.1} parent=1 // pred_check
      _
    $region27: #{tpu_custom_call.1} parent=1 // pred_check_branch
      %63 = sbr.rel (0) target = $region29
    $region28: #{tpu_custom_call.1} parent=1 // pred_region
      _
    $region29: #{tpu_custom_call.1} parent=1 // pred_fallthru
      _
    // Predicated region
    $region30: #{tpu_custom_call.1} parent=1 // pred_check
      _
    $region31: #{tpu_custom_call.1} parent=1 // pred_check_branch
      %65 = sbr.rel (0) target = $region33
    $region32: #{tpu_custom_call.1} parent=1 // pred_region
      _
    $region33: #{tpu_custom_call.1} parent=1 // pred_fallthru
      _
    // Predicated region
    $region34: #{tpu_custom_call.1} parent=1 // pred_check
      _
    $region35: #{tpu_custom_call.1} parent=1 // pred_check_branch
      %67 = sbr.rel (0) target = $region37
    $region36: #{tpu_custom_call.1} parent=1 // pred_region
      _
    $region37: #{tpu_custom_call.1} parent=1 // pred_fallthru
      _
    // Predicated region
    $region38: #{tpu_custom_call.1} parent=1 // pred_check
      _
    $region39: #{tpu_custom_call.1} parent=1 // pred_check_branch
      %69 = sbr.rel (0) target = $region41
    $region40: #{tpu_custom_call.1} parent=1 // pred_region
      %s71 = ssub.s32 2048, 2048
      %72 = vsyncadd [#allocation9], %s71
      %s73 = sshll.u32 [#allocation8], 4
      %s74 = int_to_ptr.vmem [resolvable:$true] %s73
      %79 = dma.hbm_to_vmem [thread:$0]  %s9, 2048, %s74, [#allocation9], 128, 128, 8
    $region41: #{tpu_custom_call.1} parent=1 // pred_fallthru
      _
    // Predicated region
    $region42: #{tpu_custom_call.1} parent=1 // pred_check
      _
    $region43: #{tpu_custom_call.1} parent=1 // pred_check_branch
      %81 = sbr.rel (0) target = $region45
    $region44: #{tpu_custom_call.1} parent=1 // pred_region
      _
    $region45: #{tpu_custom_call.1} parent=1 // pred_fallthru
      _
    // Predicated region
    $region46: #{tpu_custom_call.1} parent=1 // pred_check
      _
    $region47: #{tpu_custom_call.1} parent=1 // pred_check_branch
      %83 = sbr.rel (0) target = $region49
    $region48: #{tpu_custom_call.1} parent=1 // pred_region
      %84 = dma.done [#allocation3], 384
    $region49: #{tpu_custom_call.1} parent=1 // pred_fallthru
      _
    // Predicated region
    $region50: #{tpu_custom_call.1} parent=1 // pred_check
      _
    $region51: #{tpu_custom_call.1} parent=1 // pred_check_branch
      %86 = sbr.rel (0) target = $region53
    $region52: #{tpu_custom_call.1} parent=1 // pred_region
      %87 = dma.done [#allocation6], 10240
    $region53: #{tpu_custom_call.1} parent=1 // pred_fallthru
      _
    // Predicated region
    $region54: #{tpu_custom_call.1} parent=1 // pred_check
      _
    $region55: #{tpu_custom_call.1} parent=1 // pred_check_branch
      %89 = sbr.rel (0) target = $region57
    $region56: #{tpu_custom_call.1} parent=1 // pred_region
      %90 = dma.done [#allocation6], 2048
    $region57: #{tpu_custom_call.1} parent=1 // pred_fallthru
      _
    // Predicated region
    $region58: #{tpu_custom_call.1} parent=1 // pred_check
      _
    $region59: #{tpu_custom_call.1} parent=1 // pred_check_branch
      %92 = sbr.rel (0) target = $region61
    $region60: #{tpu_custom_call.1} parent=1 // pred_region
      %93 = dma.done [#allocation9], 2048
    $region61: #{tpu_custom_call.1} parent=1 // pred_fallthru
      _
    %v94 = vld [vmem:[#allocation2] sm:$0xff]
    %v95 = vld [vmem:[#allocation2 + $0x8] sm:$0xff]
    %v96 = vld [vmem:[#allocation2 + $0x10] sm:$0xff]
    %v97 = vld [vmem:[%s2] sm:$0xff]
    %v98 = vld [vmem:[%s2 + $0x8] sm:$0xff]
    %v99 = vld [vmem:[%s2 + $0x10] sm:$0xff]
    %v100 = vld [vmem:[%s2 + $0x18] sm:$0xff]
    %v101 = vld [vmem:[%s2 + $0x20] sm:$0xff]
    %v102 = vld [vmem:[%s2 + $0x28] sm:$0xff]
    %v103 = vld [vmem:[%s2 + $0x30] sm:$0xff]
    %v104 = vld [vmem:[%s2 + $0x38] sm:$0xff]
    %v105 = vld [vmem:[%s2 + $0x40] sm:$0xff]
    %v106 = vld [vmem:[%s2 + $0x48] sm:$0xff]
    %v107 = vld [vmem:[%s2 + $0x50] sm:$0xff]
    %v108 = vld [vmem:[%s2 + $0x58] sm:$0xff]
    %v109 = vld [vmem:[%s2 + $0x60] sm:$0xff]
    %v110 = vld [vmem:[%s2 + $0x68] sm:$0xff]
    %v111 = vld [vmem:[%s2 + $0x70] sm:$0xff]
    %v112 = vld [vmem:[%s2 + $0x78] sm:$0xff]
    %113 = vmatprep.subr.mxu0 0.0
    %114 = vmatpush1.msra.mxu0 %v112
    %115 = vmatprep.subr.mxu0 0.0
    %116 = vmatpush1.msra.mxu0 %v111
    %117 = vmatprep.subr.mxu0 0.0
    %118 = vmatpush1.msra.mxu0 %v110
    %119 = vmatprep.subr.mxu0 0.0
    %120 = vmatpush1.msra.mxu0 %v109
    %121 = vmatprep.subr.mxu0 0.0
    %122 = vmatpush1.msra.mxu0 %v108
    %123 = vmatprep.subr.mxu0 0.0
    %124 = vmatpush1.msra.mxu0 %v107
    %125 = vmatprep.subr.mxu0 0.0
    %126 = vmatpush1.msra.mxu0 %v106
    %127 = vmatprep.subr.mxu0 0.0
    %128 = vmatpush1.msra.mxu0 %v105
    %129 = vmatprep.subr.mxu0 0.0
    %130 = vmatpush1.msra.mxu0 %v104
    %131 = vmatprep.subr.mxu0 0.0
    %132 = vmatpush1.msra.mxu0 %v103
    %133 = vmatprep.subr.mxu0 0.0
    %134 = vmatpush1.msra.mxu0 %v102
    %135 = vmatprep.subr.mxu0 0.0
    %136 = vmatpush1.msra.mxu0 %v101
    %137 = vmatprep.subr.mxu0 0.0
    %138 = vmatpush1.msra.mxu0 %v100
    %139 = vmatprep.subr.mxu0 0.0
    %140 = vmatpush1.msra.mxu0 %v99
    %141 = vmatprep.subr.mxu0 0.0
    %142 = vmatpush1.msra.mxu0 %v98
    %143 = vmatprep.subr.mxu0 0.0
    %144 = vmatpush1.msra.mxu0 %v97
    %145 = vmatprep.subr.mxu0 0.0
    %146 = vmatpush2.msra.mxu0 0.0
    %147 = vmatprep.subr.mxu0 0.0
    %148 = vmatpush2.msra.mxu0 0.0
    %149 = vmatprep.subr.mxu0 0.0
    %150 = vmatpush2.msra.mxu0 0.0
    %151 = vmatprep.subr.mxu0 0.0
    %152 = vmatpush2.msra.mxu0 0.0
    %153 = vmatprep.subr.mxu0 0.0
    %154 = vmatpush2.msra.mxu0 0.0
    %155 = vmatprep.subr.mxu0 0.0
    %156 = vmatpush2.msra.mxu0 0.0
    %157 = vmatprep.subr.mxu0 0.0
    %158 = vmatpush2.msra.mxu0 0.0
    %159 = vmatprep.subr.mxu0 0.0
    %160 = vmatpush2.msra.mxu0 0.0
    %161 = vmatprep.subr.mxu0 0.0
    %162 = vmatpush2.msra.mxu0 0.0
    %163 = vmatprep.subr.mxu0 0.0
    %164 = vmatpush2.msra.mxu0 0.0
    %165 = vmatprep.subr.mxu0 0.0
    %166 = vmatpush2.msra.mxu0 0.0
    %167 = vmatprep.subr.mxu0 0.0
    %168 = vmatpush2.msra.mxu0 0.0
    %169 = vmatprep.subr.mxu0 0.0
    %170 = vmatpush2.msra.mxu0 0.0
    %171 = vmatprep.subr.mxu0 0.0
    %172 = vmatpush2.msra.mxu0 0.0
    %173 = vmatprep.subr.mxu0 0.0
    %174 = vmatpush2.msra.mxu0 0.0
    %175 = vmatprep.subr.mxu0 0.0
    %176 = vmatpush2.msra.mxu0 0.0
    %177 = vmatprep.mubr.f32.mxu0 0.0
    %178 = vmatmul.mubr.f32.gmra.mxu0 %v94
    %v179 = vpop.f32.mrf.mxu0
    %v180 = vadd.f32 0.0, %v179
    %v181 = vpop.f32.mrf.mxu0
    %182 = vmatprep.mubr.f32.mxu0 0.0
    %183 = vmatmul.mubr.f32.gmra.mxu0 %v95
    %v184 = vpop.f32.mrf.mxu0
    %v185 = vadd.f32 0.0, %v184
    %v186 = vpop.f32.mrf.mxu0
    %187 = vmatprep.mubr.f32.mxu0 0.0
    %188 = vmatmul.mubr.f32.gmra.mxu0 %v96
    %v189 = vpop.f32.mrf.mxu0
    %v190 = vadd.f32 0.0, %v189
    %v191 = vpop.f32.mrf.mxu0
    %192 = vdwg.mxu0
    %v193 = vlaneseq
    %v194 = vand.u32 %v193, 127
    %vm195 = vcmp.lt.s32.totalorder %v194, 32
    %v196 = vsel %vm195, 1, 0
    %v197 = vcvt.s32.f32 %v196
    %v198 = vld [vmem:[%s6] sm:$0x1]
    %v199 = vld [vmem:[%s7] sm:$0x1]
    %v200 = vld [vmem:[%s5] sm:$0x1]
    %v201 = vld [vmem:[%s1] sm:$0xff]
    %v202 = vld [vmem:[%s1 + $0x8] sm:$0xff]
    %v203 = vld [vmem:[%s1 + $0x10] sm:$0xff]
    %v204 = vld [vmem:[%s1 + $0x18] sm:$0xff]
    %v205 = vld [vmem:[%s1 + $0x20] sm:$0xff]
    %v206 = vld [vmem:[%s1 + $0x28] sm:$0xff]
    %v207 = vld [vmem:[%s1 + $0x30] sm:$0xff]
    %v208 = vld [vmem:[%s1 + $0x38] sm:$0xff]
    %v209 = vld [vmem:[%s1 + $0x40] sm:$0xff]
    %v210 = vld [vmem:[%s1 + $0x48] sm:$0xff]
    %v211 = vld [vmem:[%s1 + $0x50] sm:$0xff]
    %v212 = vld [vmem:[%s1 + $0x58] sm:$0xff]
    %v213 = vld [vmem:[%s1 + $0x60] sm:$0xff]
    %v214 = vld [vmem:[%s1 + $0x68] sm:$0xff]
    %v215 = vld [vmem:[%s1 + $0x70] sm:$0xff]
    %v216 = vld [vmem:[#allocation7] sm:$0xff]
    %v217 = vld [vmem:[#allocation7 + $0x8] sm:$0xff]
    %v218 = vld [vmem:[#allocation7 + $0x10] sm:$0xff]
    %v219 = vld [vmem:[#allocation7 + $0x18] sm:$0xff]
    %v220 = vld [vmem:[#allocation7 + $0x20] sm:$0xff]
    %v221 = vld [vmem:[#allocation7 + $0x28] sm:$0xff]
    %v222 = vld [vmem:[#allocation7 + $0x30] sm:$0xff]
    %v223 = vld [vmem:[#allocation7 + $0x38] sm:$0xff]
    %v224 = vld [vmem:[#allocation7 + $0x40] sm:$0xff]
    %v225 = vld [vmem:[#allocation7 + $0x48] sm:$0xff]
    %v226 = vld [vmem:[#allocation7 + $0x50] sm:$0xff]
    %v227 = vld [vmem:[#allocation7 + $0x58] sm:$0xff]
    %v228 = vld [vmem:[#allocation7 + $0x60] sm:$0xff]
    %v229 = vld [vmem:[#allocation7 + $0x68] sm:$0xff]
    %v230 = vld [vmem:[#allocation7 + $0x70] sm:$0xff]
    %v231 = vld [vmem:[#allocation7 + $0x78] sm:$0xff]
    %v233 = vlaneseq
    %v234 = vshrl.u32 %v233, 7
    %v235 = vsub.s32 0, %v234
    %v236 = vrot.slane %v200, %v235
    %238 = vmatprep.subr.mxu0 0.0
    %239 = vmatpush1.msra.mxu0 %v231
    %240 = vmatprep.subr.mxu0 0.0
    %241 = vmatpush1.msra.mxu0 %v230
    %242 = vmatprep.subr.mxu0 0.0
    %243 = vmatpush1.msra.mxu0 %v229
    %244 = vmatprep.subr.mxu0 0.0
    %245 = vmatpush1.msra.mxu0 %v228
    %246 = vmatprep.subr.mxu0 0.0
    %247 = vmatpush1.msra.mxu0 %v227
    %248 = vmatprep.subr.mxu0 0.0
    %249 = vmatpush1.msra.mxu0 %v226
    %250 = vmatprep.subr.mxu0 0.0
    %251 = vmatpush1.msra.mxu0 %v225
    %252 = vmatprep.subr.mxu0 0.0
    %253 = vmatpush1.msra.mxu0 %v224
    %254 = vmatprep.subr.mxu0 0.0
    %255 = vmatpush1.msra.mxu0 %v223
    %256 = vmatprep.subr.mxu0 0.0
    %257 = vmatpush1.msra.mxu0 %v222
    %258 = vmatprep.subr.mxu0 0.0
    %259 = vmatpush1.msra.mxu0 %v221
    %260 = vmatprep.subr.mxu0 0.0
    %261 = vmatpush1.msra.mxu0 %v220
    %262 = vmatprep.subr.mxu0 0.0
    %263 = vmatpush1.msra.mxu0 %v219
    %264 = vmatprep.subr.mxu0 0.0
    %265 = vmatpush1.msra.mxu0 %v218
    %266 = vmatprep.subr.mxu0 0.0
    %267 = vmatpush1.msra.mxu0 %v217
    %268 = vmatprep.subr.mxu0 0.0
    %269 = vmatpush1.msra.mxu0 %v216
    %270 = vmatprep.subr.mxu0 0.0
    %271 = vmatpush2.msra.mxu0 0.0
    %272 = vmatprep.subr.mxu0 0.0
    %273 = vmatpush2.msra.mxu0 0.0
    %274 = vmatprep.subr.mxu0 0.0
    %275 = vmatpush2.msra.mxu0 0.0
    %276 = vmatprep.subr.mxu0 0.0
    %277 = vmatpush2.msra.mxu0 0.0
    %278 = vmatprep.subr.mxu0 0.0
    %279 = vmatpush2.msra.mxu0 0.0
    %280 = vmatprep.subr.mxu0 0.0
    %281 = vmatpush2.msra.mxu0 0.0
    %282 = vmatprep.subr.mxu0 0.0
    %283 = vmatpush2.msra.mxu0 0.0
    %284 = vmatprep.subr.mxu0 0.0
    %285 = vmatpush2.msra.mxu0 0.0
    %286 = vmatprep.subr.mxu0 0.0
    %287 = vmatpush2.msra.mxu0 0.0
    %288 = vmatprep.subr.mxu0 0.0
    %289 = vmatpush2.msra.mxu0 0.0
    %290 = vmatprep.subr.mxu0 0.0
    %291 = vmatpush2.msra.mxu0 0.0
    %292 = vmatprep.subr.mxu0 0.0
    %293 = vmatpush2.msra.mxu0 0.0
    %294 = vmatprep.subr.mxu0 0.0
    %295 = vmatpush2.msra.mxu0 0.0
    %296 = vmatprep.subr.mxu0 0.0
    %297 = vmatpush2.msra.mxu0 0.0
    %298 = vmatprep.subr.mxu0 0.0
    %299 = vmatpush2.msra.mxu0 0.0
    %300 = vmatprep.subr.mxu0 0.0
    %301 = vmatpush2.msra.mxu0 0.0
    %302 = vmatprep.mubr.f32.mxu0 0.0
    %303 = vmatmul.mubr.f32.gmra.mxu0 %v180
    %v304 = vpop.f32.mrf.mxu0
    %v305 = vadd.f32 %v236, %v304
    %v306 = vpop.f32.mrf.mxu0
    %307 = vmatprep.mubr.f32.mxu0 0.0
    %308 = vmatmul.mubr.f32.gmra.mxu0 %v185
    %v309 = vpop.f32.mrf.mxu0
    %v310 = vadd.f32 %v236, %v309
    %v311 = vpop.f32.mrf.mxu0
    %312 = vmatprep.mubr.f32.mxu0 0.0
    %313 = vmatmul.mubr.f32.gmra.mxu0 %v190
    %v314 = vpop.f32.mrf.mxu0
    %v315 = vadd.f32 %v236, %v314
    %v316 = vpop.f32.mrf.mxu0
    %317 = vdwg.mxu0
    %vm318 = vcmask 195584
    %v320 = vsel %vm318, %v201, 0
    %v323 = vsel %vm318, %v202, 0
    %v326 = vsel %vm318, %v203, 0
    %v329 = vsel %vm318, %v204, 0
    %v332 = vsel %vm318, %v205, 0
    %v335 = vsel %vm318, %v206, 0
    %v338 = vsel %vm318, %v207, 0
    %v341 = vsel %vm318, %v208, 0
    %v344 = vsel %vm318, %v209, 0
    %v347 = vsel %vm318, %v210, 0
    %v350 = vsel %vm318, %v211, 0
    %v353 = vsel %vm318, %v212, 0
    %v356 = vsel %vm318, %v213, 0
    %v359 = vsel %vm318, %v214, 0
    %v362 = vsel %vm318, %v215, 0
    %364 = vmatprep.subr.mxu0 0.0
    %365 = vmatpush1.msra.mxu0 0.0
    %366 = vmatprep.subr.mxu0 0.0
    %367 = vmatpush1.msra.mxu0 0.0
    %368 = vmatprep.subr.mxu0 0.0
    %369 = vmatpush1.msra.mxu0 0.0
    %370 = vmatprep.subr.mxu0 0.0
    %371 = vmatpush1.msra.mxu0 0.0
    %372 = vmatprep.subr.mxu0 0.0
    %373 = vmatpush1.msra.mxu0 0.0
    %374 = vmatprep.subr.mxu0 0.0
    %375 = vmatpush1.msra.mxu0 0.0
    %376 = vmatprep.subr.mxu0 0.0
    %377 = vmatpush1.msra.mxu0 0.0
    %378 = vmatprep.subr.mxu0 0.0
    %379 = vmatpush1.msra.mxu0 0.0
    %380 = vmatprep.subr.mxu0 0.0
    %381 = vmatpush1.msra.mxu0 0.0
    %382 = vmatprep.subr.mxu0 0.0
    %383 = vmatpush1.msra.mxu0 0.0
    %384 = vmatprep.subr.mxu0 0.0
    %385 = vmatpush1.msra.mxu0 0.0
    %386 = vmatprep.subr.mxu0 0.0
    %387 = vmatpush1.msra.mxu0 0.0
    %388 = vmatprep.subr.mxu0 0.0
    %389 = vmatpush1.msra.mxu0 0.0
    %390 = vmatprep.subr.mxu0 0.0
    %391 = vmatpush1.msra.mxu0 %v190
    %392 = vmatprep.subr.mxu0 0.0
    %393 = vmatpush1.msra.mxu0 %v185
    %394 = vmatprep.subr.mxu0 0.0
    %395 = vmatpush1.msra.mxu0 %v180
    %396 = vmatprep.subr.mxu0 0.0
    %397 = vmatpush2.msra.mxu0 0.0
    %398 = vmatprep.subr.mxu0 0.0
    %399 = vmatpush2.msra.mxu0 0.0
    %400 = vmatprep.subr.mxu0 0.0
    %401 = vmatpush2.msra.mxu0 0.0
    %402 = vmatprep.subr.mxu0 0.0
    %403 = vmatpush2.msra.mxu0 0.0
    %404 = vmatprep.subr.mxu0 0.0
    %405 = vmatpush2.msra.mxu0 0.0
    %406 = vmatprep.subr.mxu0 0.0
    %407 = vmatpush2.msra.mxu0 0.0
    %408 = vmatprep.subr.mxu0 0.0
    %409 = vmatpush2.msra.mxu0 0.0
    %410 = vmatprep.subr.mxu0 0.0
    %411 = vmatpush2.msra.mxu0 0.0
    %412 = vmatprep.subr.mxu0 0.0
    %413 = vmatpush2.msra.mxu0 0.0
    %414 = vmatprep.subr.mxu0 0.0
    %415 = vmatpush2.msra.mxu0 0.0
    %416 = vmatprep.subr.mxu0 0.0
    %417 = vmatpush2.msra.mxu0 0.0
    %418 = vmatprep.subr.mxu0 0.0
    %419 = vmatpush2.msra.mxu0 0.0
    %420 = vmatprep.subr.mxu0 0.0
    %421 = vmatpush2.msra.mxu0 0.0
    %422 = vmatprep.subr.mxu0 0.0
    %423 = vmatpush2.msra.mxu0 0.0
    %424 = vmatprep.subr.mxu0 0.0
    %425 = vmatpush2.msra.mxu0 0.0
    %426 = vmatprep.subr.mxu0 0.0
    %427 = vmatpush2.msra.mxu0 0.0
    %428 = vmatprep.mubr.f32.mxu0 0.0
    %429 = vmatmul.mubr.f32.gmra.mxu0 %v320
    %v430 = vpop.f32.mrf.mxu0
    %v431 = vadd.f32 0.0, %v430
    %v432 = vpop.f32.mrf.mxu0
    %433 = vmatprep.mubr.f32.mxu0 0.0
    %434 = vmatmul.mubr.f32.gmra.mxu0 %v323
    %v435 = vpop.f32.mrf.mxu0
    %v436 = vadd.f32 0.0, %v435
    %v437 = vpop.f32.mrf.mxu0
    %438 = vmatprep.mubr.f32.mxu0 0.0
    %439 = vmatmul.mubr.f32.gmra.mxu0 %v326
    %v440 = vpop.f32.mrf.mxu0
    %v441 = vadd.f32 0.0, %v440
    %v442 = vpop.f32.mrf.mxu0
    %443 = vmatprep.mubr.f32.mxu0 0.0
    %444 = vmatmul.mubr.f32.gmra.mxu0 %v329
    %v445 = vpop.f32.mrf.mxu0
    %v446 = vadd.f32 0.0, %v445
    %v447 = vpop.f32.mrf.mxu0
    %448 = vmatprep.mubr.f32.mxu0 0.0
    %449 = vmatmul.mubr.f32.gmra.mxu0 %v332
    %v450 = vpop.f32.mrf.mxu0
    %v451 = vadd.f32 0.0, %v450
    %v452 = vpop.f32.mrf.mxu0
    %453 = vmatprep.mubr.f32.mxu0 0.0
    %454 = vmatmul.mubr.f32.gmra.mxu0 %v335
    %v455 = vpop.f32.mrf.mxu0
    %v456 = vadd.f32 0.0, %v455
    %v457 = vpop.f32.mrf.mxu0
    %458 = vmatprep.mubr.f32.mxu0 0.0
    %459 = vmatmul.mubr.f32.gmra.mxu0 %v338
    %v460 = vpop.f32.mrf.mxu0
    %v461 = vadd.f32 0.0, %v460
    %v462 = vpop.f32.mrf.mxu0
    %463 = vmatprep.mubr.f32.mxu0 0.0
    %464 = vmatmul.mubr.f32.gmra.mxu0 %v341
    %v465 = vpop.f32.mrf.mxu0
    %v466 = vadd.f32 0.0, %v465
    %v467 = vpop.f32.mrf.mxu0
    %468 = vmatprep.mubr.f32.mxu0 0.0
    %469 = vmatmul.mubr.f32.gmra.mxu0 %v344
    %v470 = vpop.f32.mrf.mxu0
    %v471 = vadd.f32 0.0, %v470
    %v472 = vpop.f32.mrf.mxu0
    %473 = vmatprep.mubr.f32.mxu0 0.0
    %474 = vmatmul.mubr.f32.gmra.mxu0 %v347
    %v475 = vpop.f32.mrf.mxu0
    %v476 = vadd.f32 0.0, %v475
    %v477 = vpop.f32.mrf.mxu0
    %478 = vmatprep.mubr.f32.mxu0 0.0
    %479 = vmatmul.mubr.f32.gmra.mxu0 %v350
    %v480 = vpop.f32.mrf.mxu0
    %v481 = vadd.f32 0.0, %v480
    %v482 = vpop.f32.mrf.mxu0
    %483 = vmatprep.mubr.f32.mxu0 0.0
    %484 = vmatmul.mubr.f32.gmra.mxu0 %v353
    %v485 = vpop.f32.mrf.mxu0
    %v486 = vadd.f32 0.0, %v485
    %v487 = vpop.f32.mrf.mxu0
    %488 = vmatprep.mubr.f32.mxu0 0.0
    %489 = vmatmul.mubr.f32.gmra.mxu0 %v356
    %v490 = vpop.f32.mrf.mxu0
    %v491 = vadd.f32 0.0, %v490
    %v492 = vpop.f32.mrf.mxu0
    %493 = vmatprep.mubr.f32.mxu0 0.0
    %494 = vmatmul.mubr.f32.gmra.mxu0 %v359
    %v495 = vpop.f32.mrf.mxu0
    %v496 = vadd.f32 0.0, %v495
    %v497 = vpop.f32.mrf.mxu0
    %498 = vmatprep.mubr.f32.mxu0 0.0
    %499 = vmatmul.mubr.f32.gmra.mxu0 %v362
    %v500 = vpop.f32.mrf.mxu0
    %v501 = vadd.f32 0.0, %v500
    %v502 = vpop.f32.mrf.mxu0
    %503 = vdwg.mxu0
    %v504 = vld [vmem:[#allocation5] sm:$0xff]
    %v505 = vld [vmem:[#allocation5 + $0x8] sm:$0xff]
    %v506 = vld [vmem:[#allocation5 + $0x10] sm:$0xff]
    %v507 = vld [vmem:[#allocation5 + $0x18] sm:$0xff]
    %v508 = vld [vmem:[#allocation5 + $0x20] sm:$0xff]
    %v509 = vld [vmem:[#allocation5 + $0x28] sm:$0xff]
    %v510 = vld [vmem:[#allocation5 + $0x30] sm:$0xff]
    %v511 = vld [vmem:[#allocation5 + $0x38] sm:$0xff]
    %v512 = vld [vmem:[#allocation5 + $0x40] sm:$0xff]
    %v513 = vld [vmem:[#allocation5 + $0x48] sm:$0xff]
    %v514 = vld [vmem:[#allocation5 + $0x50] sm:$0xff]
    %v515 = vld [vmem:[#allocation5 + $0x58] sm:$0xff]
    %v516 = vld [vmem:[#allocation5 + $0x60] sm:$0xff]
    %v517 = vld [vmem:[#allocation5 + $0x68] sm:$0xff]
    %v518 = vld [vmem:[#allocation5 + $0x70] sm:$0xff]
    %v519 = vld [vmem:[#allocation5 + $0x78] sm:$0xff]
    %520 = vmatprep.subr.mxu0 0.0
    %521 = vmatpush1.msra.mxu0 %v519
    %522 = vmatprep.subr.mxu0 0.0
    %523 = vmatpush1.msra.mxu0 %v518
    %524 = vmatprep.subr.mxu0 0.0
    %525 = vmatpush1.msra.mxu0 %v517
    %526 = vmatprep.subr.mxu0 0.0
    %527 = vmatpush1.msra.mxu0 %v516
    %528 = vmatprep.subr.mxu0 0.0
    %529 = vmatpush1.msra.mxu0 %v515
    %530 = vmatprep.subr.mxu0 0.0
    %531 = vmatpush1.msra.mxu0 %v514
    %532 = vmatprep.subr.mxu0 0.0
    %533 = vmatpush1.msra.mxu0 %v513
    %534 = vmatprep.subr.mxu0 0.0
    %535 = vmatpush1.msra.mxu0 %v512
    %536 = vmatprep.subr.mxu0 0.0
    %537 = vmatpush1.msra.mxu0 %v511
    %538 = vmatprep.subr.mxu0 0.0
    %539 = vmatpush1.msra.mxu0 %v510
    %540 = vmatprep.subr.mxu0 0.0
    %541 = vmatpush1.msra.mxu0 %v509
    %542 = vmatprep.subr.mxu0 0.0
    %543 = vmatpush1.msra.mxu0 %v508
    %544 = vmatprep.subr.mxu0 0.0
    %545 = vmatpush1.msra.mxu0 %v507
    %546 = vmatprep.subr.mxu0 0.0
    %547 = vmatpush1.msra.mxu0 %v506
    %548 = vmatprep.subr.mxu0 0.0
    %549 = vmatpush1.msra.mxu0 %v505
    %550 = vmatprep.subr.mxu0 0.0
    %551 = vmatpush1.msra.mxu0 %v504
    %552 = vmatprep.subr.mxu0 0.0
    %553 = vmatpush2.msra.mxu0 0.0
    %554 = vmatprep.subr.mxu0 0.0
    %555 = vmatpush2.msra.mxu0 0.0
    %556 = vmatprep.subr.mxu0 0.0
    %557 = vmatpush2.msra.mxu0 0.0
    %558 = vmatprep.subr.mxu0 0.0
    %559 = vmatpush2.msra.mxu0 0.0
    %560 = vmatprep.subr.mxu0 0.0
    %561 = vmatpush2.msra.mxu0 0.0
    %562 = vmatprep.subr.mxu0 0.0
    %563 = vmatpush2.msra.mxu0 0.0
    %564 = vmatprep.subr.mxu0 0.0
    %565 = vmatpush2.msra.mxu0 0.0
    %566 = vmatprep.subr.mxu0 0.0
    %567 = vmatpush2.msra.mxu0 0.0
    %568 = vmatprep.subr.mxu0 0.0
    %569 = vmatpush2.msra.mxu0 0.0
    %570 = vmatprep.subr.mxu0 0.0
    %571 = vmatpush2.msra.mxu0 0.0
    %572 = vmatprep.subr.mxu0 0.0
    %573 = vmatpush2.msra.mxu0 0.0
    %574 = vmatprep.subr.mxu0 0.0
    %575 = vmatpush2.msra.mxu0 0.0
    %576 = vmatprep.subr.mxu0 0.0
    %577 = vmatpush2.msra.mxu0 0.0
    %578 = vmatprep.subr.mxu0 0.0
    %579 = vmatpush2.msra.mxu0 0.0
    %580 = vmatprep.subr.mxu0 0.0
    %581 = vmatpush2.msra.mxu0 0.0
    %582 = vmatprep.subr.mxu0 0.0
    %583 = vmatpush2.msra.mxu0 0.0
    %584 = vmatprep.mubr.f32.mxu0 0.0
    %585 = vmatmul.mubr.f32.gmra.mxu0 %v431
    %v586 = vpop.f32.mrf.mxu0
    %v587 = vadd.f32 0.0, %v586
    %v588 = vpop.f32.mrf.mxu0
    %589 = vmatprep.mubr.f32.mxu0 0.0
    %590 = vmatmul.mubr.f32.gmra.mxu0 %v436
    %v591 = vpop.f32.mrf.mxu0
    %v592 = vadd.f32 0.0, %v591
    %v593 = vpop.f32.mrf.mxu0
    %594 = vmatprep.mubr.f32.mxu0 0.0
    %595 = vmatmul.mubr.f32.gmra.mxu0 %v441
    %v596 = vpop.f32.mrf.mxu0
    %v597 = vadd.f32 0.0, %v596
    %v598 = vpop.f32.mrf.mxu0
    %599 = vdwg.mxu0
    %v600 = vadd.f32 %v305, %v587
    %v601 = vadd.f32 %v310, %v592
    %v602 = vadd.f32 %v315, %v597
    %s603 = scalar_lea.vmem [#allocation5], 128
    %v604 = vld [vmem:[%s603] sm:$0xff]
    %v605 = vld [vmem:[%s603 + $0x8] sm:$0xff]
    %v606 = vld [vmem:[%s603 + $0x10] sm:$0xff]
    %v607 = vld [vmem:[%s603 + $0x18] sm:$0xff]
    %v608 = vld [vmem:[%s603 + $0x20] sm:$0xff]
    %v609 = vld [vmem:[%s603 + $0x28] sm:$0xff]
    %v610 = vld [vmem:[%s603 + $0x30] sm:$0xff]
    %v611 = vld [vmem:[%s603 + $0x38] sm:$0xff]
    %v612 = vld [vmem:[%s603 + $0x40] sm:$0xff]
    %v613 = vld [vmem:[%s603 + $0x48] sm:$0xff]
    %v614 = vld [vmem:[%s603 + $0x50] sm:$0xff]
    %v615 = vld [vmem:[%s603 + $0x58] sm:$0xff]
    %v616 = vld [vmem:[%s603 + $0x60] sm:$0xff]
    %v617 = vld [vmem:[%s603 + $0x68] sm:$0xff]
    %v618 = vld [vmem:[%s603 + $0x70] sm:$0xff]
    %v619 = vld [vmem:[%s603 + $0x78] sm:$0xff]
    %620 = vmatprep.subr.mxu0 0.0
    %621 = vmatpush1.msra.mxu0 %v619
    %622 = vmatprep.subr.mxu0 0.0
    %623 = vmatpush1.msra.mxu0 %v618
    %624 = vmatprep.subr.mxu0 0.0
    %625 = vmatpush1.msra.mxu0 %v617
    %626 = vmatprep.subr.mxu0 0.0
    %627 = vmatpush1.msra.mxu0 %v616
    %628 = vmatprep.subr.mxu0 0.0
    %629 = vmatpush1.msra.mxu0 %v615
    %630 = vmatprep.subr.mxu0 0.0
    %631 = vmatpush1.msra.mxu0 %v614
    %632 = vmatprep.subr.mxu0 0.0
    %633 = vmatpush1.msra.mxu0 %v613
    %634 = vmatprep.subr.mxu0 0.0
    %635 = vmatpush1.msra.mxu0 %v612
    %636 = vmatprep.subr.mxu0 0.0
    %637 = vmatpush1.msra.mxu0 %v611
    %638 = vmatprep.subr.mxu0 0.0
    %639 = vmatpush1.msra.mxu0 %v610
    %640 = vmatprep.subr.mxu0 0.0
    %641 = vmatpush1.msra.mxu0 %v609
    %642 = vmatprep.subr.mxu0 0.0
    %643 = vmatpush1.msra.mxu0 %v608
    %644 = vmatprep.subr.mxu0 0.0
    %645 = vmatpush1.msra.mxu0 %v607
    %646 = vmatprep.subr.mxu0 0.0
    %647 = vmatpush1.msra.mxu0 %v606
    %648 = vmatprep.subr.mxu0 0.0
    %649 = vmatpush1.msra.mxu0 %v605
    %650 = vmatprep.subr.mxu0 0.0
    %651 = vmatpush1.msra.mxu0 %v604
    %652 = vmatprep.subr.mxu0 0.0
    %653 = vmatpush2.msra.mxu0 0.0
    %654 = vmatprep.subr.mxu0 0.0
    %655 = vmatpush2.msra.mxu0 0.0
    %656 = vmatprep.subr.mxu0 0.0
    %657 = vmatpush2.msra.mxu0 0.0
    %658 = vmatprep.subr.mxu0 0.0
    %659 = vmatpush2.msra.mxu0 0.0
    %660 = vmatprep.subr.mxu0 0.0
    %661 = vmatpush2.msra.mxu0 0.0
    %662 = vmatprep.subr.mxu0 0.0
    %663 = vmatpush2.msra.mxu0 0.0
    %664 = vmatprep.subr.mxu0 0.0
    %665 = vmatpush2.msra.mxu0 0.0
    %666 = vmatprep.subr.mxu0 0.0
    %667 = vmatpush2.msra.mxu0 0.0
    %668 = vmatprep.subr.mxu0 0.0
    %669 = vmatpush2.msra.mxu0 0.0
    %670 = vmatprep.subr.mxu0 0.0
    %671 = vmatpush2.msra.mxu0 0.0
    %672 = vmatprep.subr.mxu0 0.0
    %673 = vmatpush2.msra.mxu0 0.0
    %674 = vmatprep.subr.mxu0 0.0
    %675 = vmatpush2.msra.mxu0 0.0
    %676 = vmatprep.subr.mxu0 0.0
    %677 = vmatpush2.msra.mxu0 0.0
    %678 = vmatprep.subr.mxu0 0.0
    %679 = vmatpush2.msra.mxu0 0.0
    %680 = vmatprep.subr.mxu0 0.0
    %681 = vmatpush2.msra.mxu0 0.0
    %682 = vmatprep.subr.mxu0 0.0
    %683 = vmatpush2.msra.mxu0 0.0
    %684 = vmatprep.mubr.f32.mxu0 0.0
    %685 = vmatmul.mubr.f32.gmra.mxu0 %v446
    %v686 = vpop.f32.mrf.mxu0
    %v687 = vadd.f32 0.0, %v686
    %v688 = vpop.f32.mrf.mxu0
    %689 = vmatprep.mubr.f32.mxu0 0.0
    %690 = vmatmul.mubr.f32.gmra.mxu0 %v451
    %v691 = vpop.f32.mrf.mxu0
    %v692 = vadd.f32 0.0, %v691
    %v693 = vpop.f32.mrf.mxu0
    %694 = vmatprep.mubr.f32.mxu0 0.0
    %695 = vmatmul.mubr.f32.gmra.mxu0 %v456
    %v696 = vpop.f32.mrf.mxu0
    %v697 = vadd.f32 0.0, %v696
    %v698 = vpop.f32.mrf.mxu0
    %699 = vdwg.mxu0
    %v700 = vadd.f32 %v600, %v687
    %v701 = vadd.f32 %v601, %v692
    %v702 = vadd.f32 %v602, %v697
    %s703 = scalar_lea.vmem [#allocation5], 256
    %v704 = vld [vmem:[%s703] sm:$0xff]
    %v705 = vld [vmem:[%s703 + $0x8] sm:$0xff]
    %v706 = vld [vmem:[%s703 + $0x10] sm:$0xff]
    %v707 = vld [vmem:[%s703 + $0x18] sm:$0xff]
    %v708 = vld [vmem:[%s703 + $0x20] sm:$0xff]
    %v709 = vld [vmem:[%s703 + $0x28] sm:$0xff]
    %v710 = vld [vmem:[%s703 + $0x30] sm:$0xff]
    %v711 = vld [vmem:[%s703 + $0x38] sm:$0xff]
    %v712 = vld [vmem:[%s703 + $0x40] sm:$0xff]
    %v713 = vld [vmem:[%s703 + $0x48] sm:$0xff]
    %v714 = vld [vmem:[%s703 + $0x50] sm:$0xff]
    %v715 = vld [vmem:[%s703 + $0x58] sm:$0xff]
    %v716 = vld [vmem:[%s703 + $0x60] sm:$0xff]
    %v717 = vld [vmem:[%s703 + $0x68] sm:$0xff]
    %v718 = vld [vmem:[%s703 + $0x70] sm:$0xff]
    %v719 = vld [vmem:[%s703 + $0x78] sm:$0xff]
    %720 = vmatprep.subr.mxu0 0.0
    %721 = vmatpush1.msra.mxu0 %v719
    %722 = vmatprep.subr.mxu0 0.0
    %723 = vmatpush1.msra.mxu0 %v718
    %724 = vmatprep.subr.mxu0 0.0
    %725 = vmatpush1.msra.mxu0 %v717
    %726 = vmatprep.subr.mxu0 0.0
    %727 = vmatpush1.msra.mxu0 %v716
    %728 = vmatprep.subr.mxu0 0.0
    %729 = vmatpush1.msra.mxu0 %v715
    %730 = vmatprep.subr.mxu0 0.0
    %731 = vmatpush1.msra.mxu0 %v714
    %732 = vmatprep.subr.mxu0 0.0
    %733 = vmatpush1.msra.mxu0 %v713
    %734 = vmatprep.subr.mxu0 0.0
    %735 = vmatpush1.msra.mxu0 %v712
    %736 = vmatprep.subr.mxu0 0.0
    %737 = vmatpush1.msra.mxu0 %v711
    %738 = vmatprep.subr.mxu0 0.0
    %739 = vmatpush1.msra.mxu0 %v710
    %740 = vmatprep.subr.mxu0 0.0
    %741 = vmatpush1.msra.mxu0 %v709
    %742 = vmatprep.subr.mxu0 0.0
    %743 = vmatpush1.msra.mxu0 %v708
    %744 = vmatprep.subr.mxu0 0.0
    %745 = vmatpush1.msra.mxu0 %v707
    %746 = vmatprep.subr.mxu0 0.0
    %747 = vmatpush1.msra.mxu0 %v706
    %748 = vmatprep.subr.mxu0 0.0
    %749 = vmatpush1.msra.mxu0 %v705
    %750 = vmatprep.subr.mxu0 0.0
    %751 = vmatpush1.msra.mxu0 %v704
    %752 = vmatprep.subr.mxu0 0.0
    %753 = vmatpush2.msra.mxu0 0.0
    %754 = vmatprep.subr.mxu0 0.0
    %755 = vmatpush2.msra.mxu0 0.0
    %756 = vmatprep.subr.mxu0 0.0
    %757 = vmatpush2.msra.mxu0 0.0
    %758 = vmatprep.subr.mxu0 0.0
    %759 = vmatpush2.msra.mxu0 0.0
    %760 = vmatprep.subr.mxu0 0.0
    %761 = vmatpush2.msra.mxu0 0.0
    %762 = vmatprep.subr.mxu0 0.0
    %763 = vmatpush2.msra.mxu0 0.0
    %764 = vmatprep.subr.mxu0 0.0
    %765 = vmatpush2.msra.mxu0 0.0
    %766 = vmatprep.subr.mxu0 0.0
    %767 = vmatpush2.msra.mxu0 0.0
    %768 = vmatprep.subr.mxu0 0.0
    %769 = vmatpush2.msra.mxu0 0.0
    %770 = vmatprep.subr.mxu0 0.0
    %771 = vmatpush2.msra.mxu0 0.0
    %772 = vmatprep.subr.mxu0 0.0
    %773 = vmatpush2.msra.mxu0 0.0
    %774 = vmatprep.subr.mxu0 0.0
    %775 = vmatpush2.msra.mxu0 0.0
    %776 = vmatprep.subr.mxu0 0.0
    %777 = vmatpush2.msra.mxu0 0.0
    %778 = vmatprep.subr.mxu0 0.0
    %779 = vmatpush2.msra.mxu0 0.0
    %780 = vmatprep.subr.mxu0 0.0
    %781 = vmatpush2.msra.mxu0 0.0
    %782 = vmatprep.subr.mxu0 0.0
    %783 = vmatpush2.msra.mxu0 0.0
    %784 = vmatprep.mubr.f32.mxu0 0.0
    %785 = vmatmul.mubr.f32.gmra.mxu0 %v461
    %v786 = vpop.f32.mrf.mxu0
    %v787 = vadd.f32 0.0, %v786
    %v788 = vpop.f32.mrf.mxu0
    %789 = vmatprep.mubr.f32.mxu0 0.0
    %790 = vmatmul.mubr.f32.gmra.mxu0 %v466
    %v791 = vpop.f32.mrf.mxu0
    %v792 = vadd.f32 0.0, %v791
    %v793 = vpop.f32.mrf.mxu0
    %794 = vmatprep.mubr.f32.mxu0 0.0
    %795 = vmatmul.mubr.f32.gmra.mxu0 %v471
    %v796 = vpop.f32.mrf.mxu0
    %v797 = vadd.f32 0.0, %v796
    %v798 = vpop.f32.mrf.mxu0
    %799 = vdwg.mxu0
    %v800 = vadd.f32 %v700, %v787
    %v801 = vadd.f32 %v701, %v792
    %v802 = vadd.f32 %v702, %v797
    %s803 = scalar_lea.vmem [#allocation5], 384
    %v804 = vld [vmem:[%s803] sm:$0xff]
    %v805 = vld [vmem:[%s803 + $0x8] sm:$0xff]
    %v806 = vld [vmem:[%s803 + $0x10] sm:$0xff]
    %v807 = vld [vmem:[%s803 + $0x18] sm:$0xff]
    %v808 = vld [vmem:[%s803 + $0x20] sm:$0xff]
    %v809 = vld [vmem:[%s803 + $0x28] sm:$0xff]
    %v810 = vld [vmem:[%s803 + $0x30] sm:$0xff]
    %v811 = vld [vmem:[%s803 + $0x38] sm:$0xff]
    %v812 = vld [vmem:[%s803 + $0x40] sm:$0xff]
    %v813 = vld [vmem:[%s803 + $0x48] sm:$0xff]
    %v814 = vld [vmem:[%s803 + $0x50] sm:$0xff]
    %v815 = vld [vmem:[%s803 + $0x58] sm:$0xff]
    %v816 = vld [vmem:[%s803 + $0x60] sm:$0xff]
    %v817 = vld [vmem:[%s803 + $0x68] sm:$0xff]
    %v818 = vld [vmem:[%s803 + $0x70] sm:$0xff]
    %v819 = vld [vmem:[%s803 + $0x78] sm:$0xff]
    %820 = vmatprep.subr.mxu0 0.0
    %821 = vmatpush1.msra.mxu0 %v819
    %822 = vmatprep.subr.mxu0 0.0
    %823 = vmatpush1.msra.mxu0 %v818
    %824 = vmatprep.subr.mxu0 0.0
    %825 = vmatpush1.msra.mxu0 %v817
    %826 = vmatprep.subr.mxu0 0.0
    %827 = vmatpush1.msra.mxu0 %v816
    %828 = vmatprep.subr.mxu0 0.0
    %829 = vmatpush1.msra.mxu0 %v815
    %830 = vmatprep.subr.mxu0 0.0
    %831 = vmatpush1.msra.mxu0 %v814
    %832 = vmatprep.subr.mxu0 0.0
    %833 = vmatpush1.msra.mxu0 %v813
    %834 = vmatprep.subr.mxu0 0.0
    %835 = vmatpush1.msra.mxu0 %v812
    %836 = vmatprep.subr.mxu0 0.0
    %837 = vmatpush1.msra.mxu0 %v811
    %838 = vmatprep.subr.mxu0 0.0
    %839 = vmatpush1.msra.mxu0 %v810
    %840 = vmatprep.subr.mxu0 0.0
    %841 = vmatpush1.msra.mxu0 %v809
    %842 = vmatprep.subr.mxu0 0.0
    %843 = vmatpush1.msra.mxu0 %v808
    %844 = vmatprep.subr.mxu0 0.0
    %845 = vmatpush1.msra.mxu0 %v807
    %846 = vmatprep.subr.mxu0 0.0
    %847 = vmatpush1.msra.mxu0 %v806
    %848 = vmatprep.subr.mxu0 0.0
    %849 = vmatpush1.msra.mxu0 %v805
    %850 = vmatprep.subr.mxu0 0.0
    %851 = vmatpush1.msra.mxu0 %v804
    %852 = vmatprep.subr.mxu0 0.0
    %853 = vmatpush2.msra.mxu0 0.0
    %854 = vmatprep.subr.mxu0 0.0
    %855 = vmatpush2.msra.mxu0 0.0
    %856 = vmatprep.subr.mxu0 0.0
    %857 = vmatpush2.msra.mxu0 0.0
    %858 = vmatprep.subr.mxu0 0.0
    %859 = vmatpush2.msra.mxu0 0.0
    %860 = vmatprep.subr.mxu0 0.0
    %861 = vmatpush2.msra.mxu0 0.0
    %862 = vmatprep.subr.mxu0 0.0
    %863 = vmatpush2.msra.mxu0 0.0
    %864 = vmatprep.subr.mxu0 0.0
    %865 = vmatpush2.msra.mxu0 0.0
    %866 = vmatprep.subr.mxu0 0.0
    %867 = vmatpush2.msra.mxu0 0.0
    %868 = vmatprep.subr.mxu0 0.0
    %869 = vmatpush2.msra.mxu0 0.0
    %870 = vmatprep.subr.mxu0 0.0
    %871 = vmatpush2.msra.mxu0 0.0
    %872 = vmatprep.subr.mxu0 0.0
    %873 = vmatpush2.msra.mxu0 0.0
    %874 = vmatprep.subr.mxu0 0.0
    %875 = vmatpush2.msra.mxu0 0.0
    %876 = vmatprep.subr.mxu0 0.0
    %877 = vmatpush2.msra.mxu0 0.0
    %878 = vmatprep.subr.mxu0 0.0
    %879 = vmatpush2.msra.mxu0 0.0
    %880 = vmatprep.subr.mxu0 0.0
    %881 = vmatpush2.msra.mxu0 0.0
    %882 = vmatprep.subr.mxu0 0.0
    %883 = vmatpush2.msra.mxu0 0.0
    %884 = vmatprep.mubr.f32.mxu0 0.0
    %885 = vmatmul.mubr.f32.gmra.mxu0 %v476
    %v886 = vpop.f32.mrf.mxu0
    %v887 = vadd.f32 0.0, %v886
    %v888 = vpop.f32.mrf.mxu0
    %889 = vmatprep.mubr.f32.mxu0 0.0
    %890 = vmatmul.mubr.f32.gmra.mxu0 %v481
    %v891 = vpop.f32.mrf.mxu0
    %v892 = vadd.f32 0.0, %v891
    %v893 = vpop.f32.mrf.mxu0
    %894 = vmatprep.mubr.f32.mxu0 0.0
    %895 = vmatmul.mubr.f32.gmra.mxu0 %v486
    %v896 = vpop.f32.mrf.mxu0
    %v897 = vadd.f32 0.0, %v896
    %v898 = vpop.f32.mrf.mxu0
    %899 = vdwg.mxu0
    %v900 = vadd.f32 %v800, %v887
    %v901 = vadd.f32 %v801, %v892
    %v902 = vadd.f32 %v802, %v897
    %s903 = scalar_lea.vmem [#allocation5], 512
    %v904 = vld [vmem:[%s903] sm:$0xff]
    %v905 = vld [vmem:[%s903 + $0x8] sm:$0xff]
    %v906 = vld [vmem:[%s903 + $0x10] sm:$0xff]
    %v907 = vld [vmem:[%s903 + $0x18] sm:$0xff]
    %v908 = vld [vmem:[%s903 + $0x20] sm:$0xff]
    %v909 = vld [vmem:[%s903 + $0x28] sm:$0xff]
    %v910 = vld [vmem:[%s903 + $0x30] sm:$0xff]
    %v911 = vld [vmem:[%s903 + $0x38] sm:$0xff]
    %v912 = vld [vmem:[%s903 + $0x40] sm:$0xff]
    %v913 = vld [vmem:[%s903 + $0x48] sm:$0xff]
    %v914 = vld [vmem:[%s903 + $0x50] sm:$0xff]
    %v915 = vld [vmem:[%s903 + $0x58] sm:$0xff]
    %v916 = vld [vmem:[%s903 + $0x60] sm:$0xff]
    %v917 = vld [vmem:[%s903 + $0x68] sm:$0xff]
    %v918 = vld [vmem:[%s903 + $0x70] sm:$0xff]
    %v919 = vld [vmem:[%s903 + $0x78] sm:$0xff]
    %920 = vmatprep.subr.mxu0 0.0
    %921 = vmatpush1.msra.mxu0 %v919
    %922 = vmatprep.subr.mxu0 0.0
    %923 = vmatpush1.msra.mxu0 %v918
    %924 = vmatprep.subr.mxu0 0.0
    %925 = vmatpush1.msra.mxu0 %v917
    %926 = vmatprep.subr.mxu0 0.0
    %927 = vmatpush1.msra.mxu0 %v916
    %928 = vmatprep.subr.mxu0 0.0
    %929 = vmatpush1.msra.mxu0 %v915
    %930 = vmatprep.subr.mxu0 0.0
    %931 = vmatpush1.msra.mxu0 %v914
    %932 = vmatprep.subr.mxu0 0.0
    %933 = vmatpush1.msra.mxu0 %v913
    %934 = vmatprep.subr.mxu0 0.0
    %935 = vmatpush1.msra.mxu0 %v912
    %936 = vmatprep.subr.mxu0 0.0
    %937 = vmatpush1.msra.mxu0 %v911
    %938 = vmatprep.subr.mxu0 0.0
    %939 = vmatpush1.msra.mxu0 %v910
    %940 = vmatprep.subr.mxu0 0.0
    %941 = vmatpush1.msra.mxu0 %v909
    %942 = vmatprep.subr.mxu0 0.0
    %943 = vmatpush1.msra.mxu0 %v908
    %944 = vmatprep.subr.mxu0 0.0
    %945 = vmatpush1.msra.mxu0 %v907
    %946 = vmatprep.subr.mxu0 0.0
    %947 = vmatpush1.msra.mxu0 %v906
    %948 = vmatprep.subr.mxu0 0.0
    %949 = vmatpush1.msra.mxu0 %v905
    %950 = vmatprep.subr.mxu0 0.0
    %951 = vmatpush1.msra.mxu0 %v904
    %952 = vmatprep.subr.mxu0 0.0
    %953 = vmatpush2.msra.mxu0 0.0
    %954 = vmatprep.subr.mxu0 0.0
    %955 = vmatpush2.msra.mxu0 0.0
    %956 = vmatprep.subr.mxu0 0.0
    %957 = vmatpush2.msra.mxu0 0.0
    %958 = vmatprep.subr.mxu0 0.0
    %959 = vmatpush2.msra.mxu0 0.0
    %960 = vmatprep.subr.mxu0 0.0
    %961 = vmatpush2.msra.mxu0 0.0
    %962 = vmatprep.subr.mxu0 0.0
    %963 = vmatpush2.msra.mxu0 0.0
    %964 = vmatprep.subr.mxu0 0.0
    %965 = vmatpush2.msra.mxu0 0.0
    %966 = vmatprep.subr.mxu0 0.0
    %967 = vmatpush2.msra.mxu0 0.0
    %968 = vmatprep.subr.mxu0 0.0
    %969 = vmatpush2.msra.mxu0 0.0
    %970 = vmatprep.subr.mxu0 0.0
    %971 = vmatpush2.msra.mxu0 0.0
    %972 = vmatprep.subr.mxu0 0.0
    %973 = vmatpush2.msra.mxu0 0.0
    %974 = vmatprep.subr.mxu0 0.0
    %975 = vmatpush2.msra.mxu0 0.0
    %976 = vmatprep.subr.mxu0 0.0
    %977 = vmatpush2.msra.mxu0 0.0
    %978 = vmatprep.subr.mxu0 0.0
    %979 = vmatpush2.msra.mxu0 0.0
    %980 = vmatprep.subr.mxu0 0.0
    %981 = vmatpush2.msra.mxu0 0.0
    %982 = vmatprep.subr.mxu0 0.0
    %983 = vmatpush2.msra.mxu0 0.0
    %984 = vmatprep.mubr.f32.mxu0 0.0
    %985 = vmatmul.mubr.f32.gmra.mxu0 %v491
    %v986 = vpop.f32.mrf.mxu0
    %v987 = vadd.f32 0.0, %v986
    %v988 = vpop.f32.mrf.mxu0
    %989 = vmatprep.mubr.f32.mxu0 0.0
    %990 = vmatmul.mubr.f32.gmra.mxu0 %v496
    %v991 = vpop.f32.mrf.mxu0
    %v992 = vadd.f32 0.0, %v991
    %v993 = vpop.f32.mrf.mxu0
    %994 = vmatprep.mubr.f32.mxu0 0.0
    %995 = vmatmul.mubr.f32.gmra.mxu0 %v501
    %v996 = vpop.f32.mrf.mxu0
    %v997 = vadd.f32 0.0, %v996
    %v998 = vpop.f32.mrf.mxu0
    %999 = vdwg.mxu0
    %v1000 = vadd.f32 %v900, %v987
    %v1001 = vadd.f32 %v901, %v992
    %v1002 = vadd.f32 %v902, %v997
    %vm1003 = vcmp.gt.f32.partialorder %v1000, 0.0
    %vm1004 = vcmp.gt.f32.partialorder %v1001, 0.0
    %vm1005 = vcmp.gt.f32.partialorder %v1002, 0.0
    %v1006 = vmin.f32 %v1000, 0.0
    %v1007 = vmin.f32 %v1001, 0.0
    %v1008 = vmin.f32 %v1002, 0.0
    %v1009 = vmul.f32 %v1006, 1.442695
    %v1010 = vpow.pop %v1009
    %v1011 = vmul.f32 %v1007, 1.442695
    %v1012 = vpow.pop %v1011
    %v1013 = vmul.f32 %v1008, 1.442695
    %v1014 = vpow.pop %v1013
    %v1015 = vsub.f32 %v1010, 1.0
    %v1016 = vsub.f32 %v1012, 1.0
    %v1017 = vsub.f32 %v1014, 1.0
    %v1018 = vsel %vm1003, %v1000, %v1015
    %v1019 = vsel %vm1004, %v1001, %v1016
    %v1020 = vsel %vm1005, %v1002, %v1017
    %v1021 = vmul.f32 %v1018, %v197
    %v1022 = vmul.f32 %v1019, %v197
    %v1023 = vmul.f32 %v1020, %v197
    %1024 = vadd.xlane.f32.xlu0 %v1021
    %v1025 = vpop.xlane.xlu0 %1024
    %1026 = vadd.xlane.f32.xlu0 %v1022
    %v1027 = vpop.xlane.xlu0 %1026
    %1028 = vadd.xlane.f32.xlu0 %v1023
    %v1029 = vpop.xlane.xlu0 %1028
    %v1030 = vmul.f32 %v1025, 0.03125
    %v1031 = vmul.f32 %v1027, 0.03125
    %v1032 = vmul.f32 %v1029, 0.03125
    %v1033 = vsub.f32 %v1018, %v1030
    %v1034 = vsub.f32 %v1019, %v1031
    %v1035 = vsub.f32 %v1020, %v1032
    %v1036 = vmul.f32 %v1033, %v197
    %v1037 = vmul.f32 %v1034, %v197
    %v1038 = vmul.f32 %v1035, %v197
    %v1039 = vmul.f32 %v1036, %v1036
    %v1040 = vmul.f32 %v1037, %v1037
    %v1041 = vmul.f32 %v1038, %v1038
    %1042 = vadd.xlane.f32.xlu0 %v1039
    %v1043 = vpop.xlane.xlu0 %1042
    %1044 = vadd.xlane.f32.xlu0 %v1040
    %v1045 = vpop.xlane.xlu0 %1044
    %1046 = vadd.xlane.f32.xlu0 %v1041
    %v1047 = vpop.xlane.xlu0 %1046
    %v1048 = vmul.f32 %v1043, 0.03125
    %v1049 = vmul.f32 %v1045, 0.03125
    %v1050 = vmul.f32 %v1047, 0.03125
    %v1051 = vadd.f32 %v1048, 1e-05
    %v1052 = vadd.f32 %v1049, 1e-05
    %v1053 = vadd.f32 %v1050, 1e-05
    %v1054 = vrsqrt.pop %v1051
    %v1055 = vrsqrt.pop %v1052
    %v1056 = vrsqrt.pop %v1053
    %v1057 = vmul.f32 %v1036, %v1054
    %v1058 = vmul.f32 %v1037, %v1055
    %v1059 = vmul.f32 %v1038, %v1056
    %v1061 = vlaneseq
    %v1062 = vshrl.u32 %v1061, 7
    %v1063 = vsub.s32 0, %v1062
    %v1064 = vrot.slane %v198, %v1063
    %v1066 = vmul.f32 %v1057, %v1064
    %v1067 = vmul.f32 %v1058, %v1064
    %v1068 = vmul.f32 %v1059, %v1064
    %v1070 = vlaneseq
    %v1071 = vshrl.u32 %v1070, 7
    %v1072 = vsub.s32 0, %v1071
    %v1073 = vrot.slane %v199, %v1072
    %v1075 = vadd.f32 %v1066, %v1073
    %v1076 = vadd.f32 %v1067, %v1073
    %v1077 = vadd.f32 %v1068, %v1073
    %1078 = vmatprep.subr.mxu0 0.0
    %1079 = vmatpush1.msra.mxu0 %v231
    %1080 = vmatprep.subr.mxu0 0.0
    %1081 = vmatpush1.msra.mxu0 %v230
    %1082 = vmatprep.subr.mxu0 0.0
    %1083 = vmatpush1.msra.mxu0 %v229
    %1084 = vmatprep.subr.mxu0 0.0
    %1085 = vmatpush1.msra.mxu0 %v228
    %1086 = vmatprep.subr.mxu0 0.0
    %1087 = vmatpush1.msra.mxu0 %v227
    %1088 = vmatprep.subr.mxu0 0.0
    %1089 = vmatpush1.msra.mxu0 %v226
    %1090 = vmatprep.subr.mxu0 0.0
    %1091 = vmatpush1.msra.mxu0 %v225
    %1092 = vmatprep.subr.mxu0 0.0
    %1093 = vmatpush1.msra.mxu0 %v224
    %1094 = vmatprep.subr.mxu0 0.0
    %1095 = vmatpush1.msra.mxu0 %v223
    %1096 = vmatprep.subr.mxu0 0.0
    %1097 = vmatpush1.msra.mxu0 %v222
    %1098 = vmatprep.subr.mxu0 0.0
    %1099 = vmatpush1.msra.mxu0 %v221
    %1100 = vmatprep.subr.mxu0 0.0
    %1101 = vmatpush1.msra.mxu0 %v220
    %1102 = vmatprep.subr.mxu0 0.0
    %1103 = vmatpush1.msra.mxu0 %v219
    %1104 = vmatprep.subr.mxu0 0.0
    %1105 = vmatpush1.msra.mxu0 %v218
    %1106 = vmatprep.subr.mxu0 0.0
    %1107 = vmatpush1.msra.mxu0 %v217
    %1108 = vmatprep.subr.mxu0 0.0
    %1109 = vmatpush1.msra.mxu0 %v216
    %1110 = vmatprep.subr.mxu0 0.0
    %1111 = vmatpush2.msra.mxu0 0.0
    %1112 = vmatprep.subr.mxu0 0.0
    %1113 = vmatpush2.msra.mxu0 0.0
    %1114 = vmatprep.subr.mxu0 0.0
    %1115 = vmatpush2.msra.mxu0 0.0
    %1116 = vmatprep.subr.mxu0 0.0
    %1117 = vmatpush2.msra.mxu0 0.0
    %1118 = vmatprep.subr.mxu0 0.0
    %1119 = vmatpush2.msra.mxu0 0.0
    %1120 = vmatprep.subr.mxu0 0.0
    %1121 = vmatpush2.msra.mxu0 0.0
    %1122 = vmatprep.subr.mxu0 0.0
    %1123 = vmatpush2.msra.mxu0 0.0
    %1124 = vmatprep.subr.mxu0 0.0
    %1125 = vmatpush2.msra.mxu0 0.0
    %1126 = vmatprep.subr.mxu0 0.0
    %1127 = vmatpush2.msra.mxu0 0.0
    %1128 = vmatprep.subr.mxu0 0.0
    %1129 = vmatpush2.msra.mxu0 0.0
    %1130 = vmatprep.subr.mxu0 0.0
    %1131 = vmatpush2.msra.mxu0 0.0
    %1132 = vmatprep.subr.mxu0 0.0
    %1133 = vmatpush2.msra.mxu0 0.0
    %1134 = vmatprep.subr.mxu0 0.0
    %1135 = vmatpush2.msra.mxu0 0.0
    %1136 = vmatprep.subr.mxu0 0.0
    %1137 = vmatpush2.msra.mxu0 0.0
    %1138 = vmatprep.subr.mxu0 0.0
    %1139 = vmatpush2.msra.mxu0 0.0
    %1140 = vmatprep.subr.mxu0 0.0
    %1141 = vmatpush2.msra.mxu0 0.0
    %1142 = vmatprep.mubr.f32.mxu0 0.0
    %1143 = vmatmul.mubr.f32.gmra.mxu0 %v1075
    %v1144 = vpop.f32.mrf.mxu0
    %v1145 = vadd.f32 %v236, %v1144
    %v1146 = vpop.f32.mrf.mxu0
    %1147 = vmatprep.mubr.f32.mxu0 0.0
    %1148 = vmatmul.mubr.f32.gmra.mxu0 %v1076
    %v1149 = vpop.f32.mrf.mxu0
    %v1150 = vadd.f32 %v236, %v1149
    %v1151 = vpop.f32.mrf.mxu0
    %1152 = vmatprep.mubr.f32.mxu0 0.0
    %1153 = vmatmul.mubr.f32.gmra.mxu0 %v1077
    %v1154 = vpop.f32.mrf.mxu0
    %v1155 = vadd.f32 %v236, %v1154
    %v1156 = vpop.f32.mrf.mxu0
    %1157 = vdwg.mxu0
    %1158 = vmatprep.subr.mxu0 0.0
    %1159 = vmatpush1.msra.mxu0 0.0
    %1160 = vmatprep.subr.mxu0 0.0
    %1161 = vmatpush1.msra.mxu0 0.0
    %1162 = vmatprep.subr.mxu0 0.0
    %1163 = vmatpush1.msra.mxu0 0.0
    %1164 = vmatprep.subr.mxu0 0.0
    %1165 = vmatpush1.msra.mxu0 0.0
    %1166 = vmatprep.subr.mxu0 0.0
    %1167 = vmatpush1.msra.mxu0 0.0
    %1168 = vmatprep.subr.mxu0 0.0
    %1169 = vmatpush1.msra.mxu0 0.0
    %1170 = vmatprep.subr.mxu0 0.0
    %1171 = vmatpush1.msra.mxu0 0.0
    %1172 = vmatprep.subr.mxu0 0.0
    %1173 = vmatpush1.msra.mxu0 0.0
    %1174 = vmatprep.subr.mxu0 0.0
    %1175 = vmatpush1.msra.mxu0 0.0
    %1176 = vmatprep.subr.mxu0 0.0
    %1177 = vmatpush1.msra.mxu0 0.0
    %1178 = vmatprep.subr.mxu0 0.0
    %1179 = vmatpush1.msra.mxu0 0.0
    %1180 = vmatprep.subr.mxu0 0.0
    %1181 = vmatpush1.msra.mxu0 0.0
    %1182 = vmatprep.subr.mxu0 0.0
    %1183 = vmatpush1.msra.mxu0 0.0
    %1184 = vmatprep.subr.mxu0 0.0
    %1185 = vmatpush1.msra.mxu0 %v1077
    %1186 = vmatprep.subr.mxu0 0.0
    %1187 = vmatpush1.msra.mxu0 %v1076
    %1188 = vmatprep.subr.mxu0 0.0
    %1189 = vmatpush1.msra.mxu0 %v1075
    %1190 = vmatprep.subr.mxu0 0.0
    %1191 = vmatpush2.msra.mxu0 0.0
    %1192 = vmatprep.subr.mxu0 0.0
    %1193 = vmatpush2.msra.mxu0 0.0
    %1194 = vmatprep.subr.mxu0 0.0
    %1195 = vmatpush2.msra.mxu0 0.0
    %1196 = vmatprep.subr.mxu0 0.0
    %1197 = vmatpush2.msra.mxu0 0.0
    %1198 = vmatprep.subr.mxu0 0.0
    %1199 = vmatpush2.msra.mxu0 0.0
    %1200 = vmatprep.subr.mxu0 0.0
    %1201 = vmatpush2.msra.mxu0 0.0
    %1202 = vmatprep.subr.mxu0 0.0
    %1203 = vmatpush2.msra.mxu0 0.0
    %1204 = vmatprep.subr.mxu0 0.0
    %1205 = vmatpush2.msra.mxu0 0.0
    %1206 = vmatprep.subr.mxu0 0.0
    %1207 = vmatpush2.msra.mxu0 0.0
    %1208 = vmatprep.subr.mxu0 0.0
    %1209 = vmatpush2.msra.mxu0 0.0
    %1210 = vmatprep.subr.mxu0 0.0
    %1211 = vmatpush2.msra.mxu0 0.0
    %1212 = vmatprep.subr.mxu0 0.0
    %1213 = vmatpush2.msra.mxu0 0.0
    %1214 = vmatprep.subr.mxu0 0.0
    %1215 = vmatpush2.msra.mxu0 0.0
    %1216 = vmatprep.subr.mxu0 0.0
    %1217 = vmatpush2.msra.mxu0 0.0
    %1218 = vmatprep.subr.mxu0 0.0
    %1219 = vmatpush2.msra.mxu0 0.0
    %1220 = vmatprep.subr.mxu0 0.0
    %1221 = vmatpush2.msra.mxu0 0.0
    %1222 = vmatprep.mubr.f32.mxu0 0.0
    %1223 = vmatmul.mubr.f32.gmra.mxu0 %v320
    %v1224 = vpop.f32.mrf.mxu0
    %v1225 = vadd.f32 0.0, %v1224
    %v1226 = vpop.f32.mrf.mxu0
    %1227 = vmatprep.mubr.f32.mxu0 0.0
    %1228 = vmatmul.mubr.f32.gmra.mxu0 %v323
    %v1229 = vpop.f32.mrf.mxu0
    %v1230 = vadd.f32 0.0, %v1229
    %v1231 = vpop.f32.mrf.mxu0
    %1232 = vmatprep.mubr.f32.mxu0 0.0
    %1233 = vmatmul.mubr.f32.gmra.mxu0 %v326
    %v1234 = vpop.f32.mrf.mxu0
    %v1235 = vadd.f32 0.0, %v1234
    %v1236 = vpop.f32.mrf.mxu0
    %1237 = vmatprep.mubr.f32.mxu0 0.0
    %1238 = vmatmul.mubr.f32.gmra.mxu0 %v329
    %v1239 = vpop.f32.mrf.mxu0
    %v1240 = vadd.f32 0.0, %v1239
    %v1241 = vpop.f32.mrf.mxu0
    %1242 = vmatprep.mubr.f32.mxu0 0.0
    %1243 = vmatmul.mubr.f32.gmra.mxu0 %v332
    %v1244 = vpop.f32.mrf.mxu0
    %v1245 = vadd.f32 0.0, %v1244
    %v1246 = vpop.f32.mrf.mxu0
    %1247 = vmatprep.mubr.f32.mxu0 0.0
    %1248 = vmatmul.mubr.f32.gmra.mxu0 %v335
    %v1249 = vpop.f32.mrf.mxu0
    %v1250 = vadd.f32 0.0, %v1249
    %v1251 = vpop.f32.mrf.mxu0
    %1252 = vmatprep.mubr.f32.mxu0 0.0
    %1253 = vmatmul.mubr.f32.gmra.mxu0 %v338
    %v1254 = vpop.f32.mrf.mxu0
    %v1255 = vadd.f32 0.0, %v1254
    %v1256 = vpop.f32.mrf.mxu0
    %1257 = vmatprep.mubr.f32.mxu0 0.0
    %1258 = vmatmul.mubr.f32.gmra.mxu0 %v341
    %v1259 = vpop.f32.mrf.mxu0
    %v1260 = vadd.f32 0.0, %v1259
    %v1261 = vpop.f32.mrf.mxu0
    %1262 = vmatprep.mubr.f32.mxu0 0.0
    %1263 = vmatmul.mubr.f32.gmra.mxu0 %v344
    %v1264 = vpop.f32.mrf.mxu0
    %v1265 = vadd.f32 0.0, %v1264
    %v1266 = vpop.f32.mrf.mxu0
    %1267 = vmatprep.mubr.f32.mxu0 0.0
    %1268 = vmatmul.mubr.f32.gmra.mxu0 %v347
    %v1269 = vpop.f32.mrf.mxu0
    %v1270 = vadd.f32 0.0, %v1269
    %v1271 = vpop.f32.mrf.mxu0
    %1272 = vmatprep.mubr.f32.mxu0 0.0
    %1273 = vmatmul.mubr.f32.gmra.mxu0 %v350
    %v1274 = vpop.f32.mrf.mxu0
    %v1275 = vadd.f32 0.0, %v1274
    %v1276 = vpop.f32.mrf.mxu0
    %1277 = vmatprep.mubr.f32.mxu0 0.0
    %1278 = vmatmul.mubr.f32.gmra.mxu0 %v353
    %v1279 = vpop.f32.mrf.mxu0
    %v1280 = vadd.f32 0.0, %v1279
    %v1281 = vpop.f32.mrf.mxu0
    %1282 = vmatprep.mubr.f32.mxu0 0.0
    %1283 = vmatmul.mubr.f32.gmra.mxu0 %v356
    %v1284 = vpop.f32.mrf.mxu0
    %v1285 = vadd.f32 0.0, %v1284
    %v1286 = vpop.f32.mrf.mxu0
    %1287 = vmatprep.mubr.f32.mxu0 0.0
    %1288 = vmatmul.mubr.f32.gmra.mxu0 %v359
    %v1289 = vpop.f32.mrf.mxu0
    %v1290 = vadd.f32 0.0, %v1289
    %v1291 = vpop.f32.mrf.mxu0
    %1292 = vmatprep.mubr.f32.mxu0 0.0
    %1293 = vmatmul.mubr.f32.gmra.mxu0 %v362
    %v1294 = vpop.f32.mrf.mxu0
    %v1295 = vadd.f32 0.0, %v1294
    %v1296 = vpop.f32.mrf.mxu0
    %1297 = vdwg.mxu0
    %1298 = vmatprep.subr.mxu0 0.0
    %1299 = vmatpush1.msra.mxu0 %v519
    %1300 = vmatprep.subr.mxu0 0.0
    %1301 = vmatpush1.msra.mxu0 %v518
    %1302 = vmatprep.subr.mxu0 0.0
    %1303 = vmatpush1.msra.mxu0 %v517
    %1304 = vmatprep.subr.mxu0 0.0
    %1305 = vmatpush1.msra.mxu0 %v516
    %1306 = vmatprep.subr.mxu0 0.0
    %1307 = vmatpush1.msra.mxu0 %v515
    %1308 = vmatprep.subr.mxu0 0.0
    %1309 = vmatpush1.msra.mxu0 %v514
    %1310 = vmatprep.subr.mxu0 0.0
    %1311 = vmatpush1.msra.mxu0 %v513
    %1312 = vmatprep.subr.mxu0 0.0
    %1313 = vmatpush1.msra.mxu0 %v512
    %1314 = vmatprep.subr.mxu0 0.0
    %1315 = vmatpush1.msra.mxu0 %v511
    %1316 = vmatprep.subr.mxu0 0.0
    %1317 = vmatpush1.msra.mxu0 %v510
    %1318 = vmatprep.subr.mxu0 0.0
    %1319 = vmatpush1.msra.mxu0 %v509
    %1320 = vmatprep.subr.mxu0 0.0
    %1321 = vmatpush1.msra.mxu0 %v508
    %1322 = vmatprep.subr.mxu0 0.0
    %1323 = vmatpush1.msra.mxu0 %v507
    %1324 = vmatprep.subr.mxu0 0.0
    %1325 = vmatpush1.msra.mxu0 %v506
    %1326 = vmatprep.subr.mxu0 0.0
    %1327 = vmatpush1.msra.mxu0 %v505
    %1328 = vmatprep.subr.mxu0 0.0
    %1329 = vmatpush1.msra.mxu0 %v504
    %1330 = vmatprep.subr.mxu0 0.0
    %1331 = vmatpush2.msra.mxu0 0.0
    %1332 = vmatprep.subr.mxu0 0.0
    %1333 = vmatpush2.msra.mxu0 0.0
    %1334 = vmatprep.subr.mxu0 0.0
    %1335 = vmatpush2.msra.mxu0 0.0
    %1336 = vmatprep.subr.mxu0 0.0
    %1337 = vmatpush2.msra.mxu0 0.0
    %1338 = vmatprep.subr.mxu0 0.0
    %1339 = vmatpush2.msra.mxu0 0.0
    %1340 = vmatprep.subr.mxu0 0.0
    %1341 = vmatpush2.msra.mxu0 0.0
    %1342 = vmatprep.subr.mxu0 0.0
    %1343 = vmatpush2.msra.mxu0 0.0
    %1344 = vmatprep.subr.mxu0 0.0
    %1345 = vmatpush2.msra.mxu0 0.0
    %1346 = vmatprep.subr.mxu0 0.0
    %1347 = vmatpush2.msra.mxu0 0.0
    %1348 = vmatprep.subr.mxu0 0.0
    %1349 = vmatpush2.msra.mxu0 0.0
    %1350 = vmatprep.subr.mxu0 0.0
    %1351 = vmatpush2.msra.mxu0 0.0
    %1352 = vmatprep.subr.mxu0 0.0
    %1353 = vmatpush2.msra.mxu0 0.0
    %1354 = vmatprep.subr.mxu0 0.0
    %1355 = vmatpush2.msra.mxu0 0.0
    %1356 = vmatprep.subr.mxu0 0.0
    %1357 = vmatpush2.msra.mxu0 0.0
    %1358 = vmatprep.subr.mxu0 0.0
    %1359 = vmatpush2.msra.mxu0 0.0
    %1360 = vmatprep.subr.mxu0 0.0
    %1361 = vmatpush2.msra.mxu0 0.0
    %1362 = vmatprep.mubr.f32.mxu0 0.0
    %1363 = vmatmul.mubr.f32.gmra.mxu0 %v1225
    %v1364 = vpop.f32.mrf.mxu0
    %v1365 = vadd.f32 0.0, %v1364
    %v1366 = vpop.f32.mrf.mxu0
    %1367 = vmatprep.mubr.f32.mxu0 0.0
    %1368 = vmatmul.mubr.f32.gmra.mxu0 %v1230
    %v1369 = vpop.f32.mrf.mxu0
    %v1370 = vadd.f32 0.0, %v1369
    %v1371 = vpop.f32.mrf.mxu0
    %1372 = vmatprep.mubr.f32.mxu0 0.0
    %1373 = vmatmul.mubr.f32.gmra.mxu0 %v1235
    %v1374 = vpop.f32.mrf.mxu0
    %v1375 = vadd.f32 0.0, %v1374
    %v1376 = vpop.f32.mrf.mxu0
    %1377 = vdwg.mxu0
    %v1378 = vadd.f32 %v1145, %v1365
    %v1379 = vadd.f32 %v1150, %v1370
    %v1380 = vadd.f32 %v1155, %v1375
    %1381 = vmatprep.subr.mxu0 0.0
    %1382 = vmatpush1.msra.mxu0 %v619
    %1383 = vmatprep.subr.mxu0 0.0
    %1384 = vmatpush1.msra.mxu0 %v618
    %1385 = vmatprep.subr.mxu0 0.0
    %1386 = vmatpush1.msra.mxu0 %v617
    %1387 = vmatprep.subr.mxu0 0.0
    %1388 = vmatpush1.msra.mxu0 %v616
    %1389 = vmatprep.subr.mxu0 0.0
    %1390 = vmatpush1.msra.mxu0 %v615
    %1391 = vmatprep.subr.mxu0 0.0
    %1392 = vmatpush1.msra.mxu0 %v614
    %1393 = vmatprep.subr.mxu0 0.0
    %1394 = vmatpush1.msra.mxu0 %v613
    %1395 = vmatprep.subr.mxu0 0.0
    %1396 = vmatpush1.msra.mxu0 %v612
    %1397 = vmatprep.subr.mxu0 0.0
    %1398 = vmatpush1.msra.mxu0 %v611
    %1399 = vmatprep.subr.mxu0 0.0
    %1400 = vmatpush1.msra.mxu0 %v610
    %1401 = vmatprep.subr.mxu0 0.0
    %1402 = vmatpush1.msra.mxu0 %v609
    %1403 = vmatprep.subr.mxu0 0.0
    %1404 = vmatpush1.msra.mxu0 %v608
    %1405 = vmatprep.subr.mxu0 0.0
    %1406 = vmatpush1.msra.mxu0 %v607
    %1407 = vmatprep.subr.mxu0 0.0
    %1408 = vmatpush1.msra.mxu0 %v606
    %1409 = vmatprep.subr.mxu0 0.0
    %1410 = vmatpush1.msra.mxu0 %v605
    %1411 = vmatprep.subr.mxu0 0.0
    %1412 = vmatpush1.msra.mxu0 %v604
    %1413 = vmatprep.subr.mxu0 0.0
    %1414 = vmatpush2.msra.mxu0 0.0
    %1415 = vmatprep.subr.mxu0 0.0
    %1416 = vmatpush2.msra.mxu0 0.0
    %1417 = vmatprep.subr.mxu0 0.0
    %1418 = vmatpush2.msra.mxu0 0.0
    %1419 = vmatprep.subr.mxu0 0.0
    %1420 = vmatpush2.msra.mxu0 0.0
    %1421 = vmatprep.subr.mxu0 0.0
    %1422 = vmatpush2.msra.mxu0 0.0
    %1423 = vmatprep.subr.mxu0 0.0
    %1424 = vmatpush2.msra.mxu0 0.0
    %1425 = vmatprep.subr.mxu0 0.0
    %1426 = vmatpush2.msra.mxu0 0.0
    %1427 = vmatprep.subr.mxu0 0.0
    %1428 = vmatpush2.msra.mxu0 0.0
    %1429 = vmatprep.subr.mxu0 0.0
    %1430 = vmatpush2.msra.mxu0 0.0
    %1431 = vmatprep.subr.mxu0 0.0
    %1432 = vmatpush2.msra.mxu0 0.0
    %1433 = vmatprep.subr.mxu0 0.0
    %1434 = vmatpush2.msra.mxu0 0.0
    %1435 = vmatprep.subr.mxu0 0.0
    %1436 = vmatpush2.msra.mxu0 0.0
    %1437 = vmatprep.subr.mxu0 0.0
    %1438 = vmatpush2.msra.mxu0 0.0
    %1439 = vmatprep.subr.mxu0 0.0
    %1440 = vmatpush2.msra.mxu0 0.0
    %1441 = vmatprep.subr.mxu0 0.0
    %1442 = vmatpush2.msra.mxu0 0.0
    %1443 = vmatprep.subr.mxu0 0.0
    %1444 = vmatpush2.msra.mxu0 0.0
    %1445 = vmatprep.mubr.f32.mxu0 0.0
    %1446 = vmatmul.mubr.f32.gmra.mxu0 %v1240
    %v1447 = vpop.f32.mrf.mxu0
    %v1448 = vadd.f32 0.0, %v1447
    %v1449 = vpop.f32.mrf.mxu0
    %1450 = vmatprep.mubr.f32.mxu0 0.0
    %1451 = vmatmul.mubr.f32.gmra.mxu0 %v1245
    %v1452 = vpop.f32.mrf.mxu0
    %v1453 = vadd.f32 0.0, %v1452
    %v1454 = vpop.f32.mrf.mxu0
    %1455 = vmatprep.mubr.f32.mxu0 0.0
    %1456 = vmatmul.mubr.f32.gmra.mxu0 %v1250
    %v1457 = vpop.f32.mrf.mxu0
    %v1458 = vadd.f32 0.0, %v1457
    %v1459 = vpop.f32.mrf.mxu0
    %1460 = vdwg.mxu0
    %v1461 = vadd.f32 %v1378, %v1448
    %v1462 = vadd.f32 %v1379, %v1453
    %v1463 = vadd.f32 %v1380, %v1458
    %1464 = vmatprep.subr.mxu0 0.0
    %1465 = vmatpush1.msra.mxu0 %v719
    %1466 = vmatprep.subr.mxu0 0.0
    %1467 = vmatpush1.msra.mxu0 %v718
    %1468 = vmatprep.subr.mxu0 0.0
    %1469 = vmatpush1.msra.mxu0 %v717
    %1470 = vmatprep.subr.mxu0 0.0
    %1471 = vmatpush1.msra.mxu0 %v716
    %1472 = vmatprep.subr.mxu0 0.0
    %1473 = vmatpush1.msra.mxu0 %v715
    %1474 = vmatprep.subr.mxu0 0.0
    %1475 = vmatpush1.msra.mxu0 %v714
    %1476 = vmatprep.subr.mxu0 0.0
    %1477 = vmatpush1.msra.mxu0 %v713
    %1478 = vmatprep.subr.mxu0 0.0
    %1479 = vmatpush1.msra.mxu0 %v712
    %1480 = vmatprep.subr.mxu0 0.0
    %1481 = vmatpush1.msra.mxu0 %v711
    %1482 = vmatprep.subr.mxu0 0.0
    %1483 = vmatpush1.msra.mxu0 %v710
    %1484 = vmatprep.subr.mxu0 0.0
    %1485 = vmatpush1.msra.mxu0 %v709
    %1486 = vmatprep.subr.mxu0 0.0
    %1487 = vmatpush1.msra.mxu0 %v708
    %1488 = vmatprep.subr.mxu0 0.0
    %1489 = vmatpush1.msra.mxu0 %v707
    %1490 = vmatprep.subr.mxu0 0.0
    %1491 = vmatpush1.msra.mxu0 %v706
    %1492 = vmatprep.subr.mxu0 0.0
    %1493 = vmatpush1.msra.mxu0 %v705
    %1494 = vmatprep.subr.mxu0 0.0
    %1495 = vmatpush1.msra.mxu0 %v704
    %1496 = vmatprep.subr.mxu0 0.0
    %1497 = vmatpush2.msra.mxu0 0.0
    %1498 = vmatprep.subr.mxu0 0.0
    %1499 = vmatpush2.msra.mxu0 0.0
    %1500 = vmatprep.subr.mxu0 0.0
    %1501 = vmatpush2.msra.mxu0 0.0
    %1502 = vmatprep.subr.mxu0 0.0
    %1503 = vmatpush2.msra.mxu0 0.0
    %1504 = vmatprep.subr.mxu0 0.0
    %1505 = vmatpush2.msra.mxu0 0.0
    %1506 = vmatprep.subr.mxu0 0.0
    %1507 = vmatpush2.msra.mxu0 0.0
    %1508 = vmatprep.subr.mxu0 0.0
    %1509 = vmatpush2.msra.mxu0 0.0
    %1510 = vmatprep.subr.mxu0 0.0
    %1511 = vmatpush2.msra.mxu0 0.0
    %1512 = vmatprep.subr.mxu0 0.0
    %1513 = vmatpush2.msra.mxu0 0.0
    %1514 = vmatprep.subr.mxu0 0.0
    %1515 = vmatpush2.msra.mxu0 0.0
    %1516 = vmatprep.subr.mxu0 0.0
    %1517 = vmatpush2.msra.mxu0 0.0
    %1518 = vmatprep.subr.mxu0 0.0
    %1519 = vmatpush2.msra.mxu0 0.0
    %1520 = vmatprep.subr.mxu0 0.0
    %1521 = vmatpush2.msra.mxu0 0.0
    %1522 = vmatprep.subr.mxu0 0.0
    %1523 = vmatpush2.msra.mxu0 0.0
    %1524 = vmatprep.subr.mxu0 0.0
    %1525 = vmatpush2.msra.mxu0 0.0
    %1526 = vmatprep.subr.mxu0 0.0
    %1527 = vmatpush2.msra.mxu0 0.0
    %1528 = vmatprep.mubr.f32.mxu0 0.0
    %1529 = vmatmul.mubr.f32.gmra.mxu0 %v1255
    %v1530 = vpop.f32.mrf.mxu0
    %v1531 = vadd.f32 0.0, %v1530
    %v1532 = vpop.f32.mrf.mxu0
    %1533 = vmatprep.mubr.f32.mxu0 0.0
    %1534 = vmatmul.mubr.f32.gmra.mxu0 %v1260
    %v1535 = vpop.f32.mrf.mxu0
    %v1536 = vadd.f32 0.0, %v1535
    %v1537 = vpop.f32.mrf.mxu0
    %1538 = vmatprep.mubr.f32.mxu0 0.0
    %1539 = vmatmul.mubr.f32.gmra.mxu0 %v1265
    %v1540 = vpop.f32.mrf.mxu0
    %v1541 = vadd.f32 0.0, %v1540
    %v1542 = vpop.f32.mrf.mxu0
    %1543 = vdwg.mxu0
    %v1544 = vadd.f32 %v1461, %v1531
    %v1545 = vadd.f32 %v1462, %v1536
    %v1546 = vadd.f32 %v1463, %v1541
    %1547 = vmatprep.subr.mxu0 0.0
    %1548 = vmatpush1.msra.mxu0 %v819
    %1549 = vmatprep.subr.mxu0 0.0
    %1550 = vmatpush1.msra.mxu0 %v818
    %1551 = vmatprep.subr.mxu0 0.0
    %1552 = vmatpush1.msra.mxu0 %v817
    %1553 = vmatprep.subr.mxu0 0.0
    %1554 = vmatpush1.msra.mxu0 %v816
    %1555 = vmatprep.subr.mxu0 0.0
    %1556 = vmatpush1.msra.mxu0 %v815
    %1557 = vmatprep.subr.mxu0 0.0
    %1558 = vmatpush1.msra.mxu0 %v814
    %1559 = vmatprep.subr.mxu0 0.0
    %1560 = vmatpush1.msra.mxu0 %v813
    %1561 = vmatprep.subr.mxu0 0.0
    %1562 = vmatpush1.msra.mxu0 %v812
    %1563 = vmatprep.subr.mxu0 0.0
    %1564 = vmatpush1.msra.mxu0 %v811
    %1565 = vmatprep.subr.mxu0 0.0
    %1566 = vmatpush1.msra.mxu0 %v810
    %1567 = vmatprep.subr.mxu0 0.0
    %1568 = vmatpush1.msra.mxu0 %v809
    %1569 = vmatprep.subr.mxu0 0.0
    %1570 = vmatpush1.msra.mxu0 %v808
    %1571 = vmatprep.subr.mxu0 0.0
    %1572 = vmatpush1.msra.mxu0 %v807
    %1573 = vmatprep.subr.mxu0 0.0
    %1574 = vmatpush1.msra.mxu0 %v806
    %1575 = vmatprep.subr.mxu0 0.0
    %1576 = vmatpush1.msra.mxu0 %v805
    %1577 = vmatprep.subr.mxu0 0.0
    %1578 = vmatpush1.msra.mxu0 %v804
    %1579 = vmatprep.subr.mxu0 0.0
    %1580 = vmatpush2.msra.mxu0 0.0
    %1581 = vmatprep.subr.mxu0 0.0
    %1582 = vmatpush2.msra.mxu0 0.0
    %1583 = vmatprep.subr.mxu0 0.0
    %1584 = vmatpush2.msra.mxu0 0.0
    %1585 = vmatprep.subr.mxu0 0.0
    %1586 = vmatpush2.msra.mxu0 0.0
    %1587 = vmatprep.subr.mxu0 0.0
    %1588 = vmatpush2.msra.mxu0 0.0
    %1589 = vmatprep.subr.mxu0 0.0
    %1590 = vmatpush2.msra.mxu0 0.0
    %1591 = vmatprep.subr.mxu0 0.0
    %1592 = vmatpush2.msra.mxu0 0.0
    %1593 = vmatprep.subr.mxu0 0.0
    %1594 = vmatpush2.msra.mxu0 0.0
    %1595 = vmatprep.subr.mxu0 0.0
    %1596 = vmatpush2.msra.mxu0 0.0
    %1597 = vmatprep.subr.mxu0 0.0
    %1598 = vmatpush2.msra.mxu0 0.0
    %1599 = vmatprep.subr.mxu0 0.0
    %1600 = vmatpush2.msra.mxu0 0.0
    %1601 = vmatprep.subr.mxu0 0.0
    %1602 = vmatpush2.msra.mxu0 0.0
    %1603 = vmatprep.subr.mxu0 0.0
    %1604 = vmatpush2.msra.mxu0 0.0
    %1605 = vmatprep.subr.mxu0 0.0
    %1606 = vmatpush2.msra.mxu0 0.0
    %1607 = vmatprep.subr.mxu0 0.0
    %1608 = vmatpush2.msra.mxu0 0.0
    %1609 = vmatprep.subr.mxu0 0.0
    %1610 = vmatpush2.msra.mxu0 0.0
    %1611 = vmatprep.mubr.f32.mxu0 0.0
    %1612 = vmatmul.mubr.f32.gmra.mxu0 %v1270
    %v1613 = vpop.f32.mrf.mxu0
    %v1614 = vadd.f32 0.0, %v1613
    %v1615 = vpop.f32.mrf.mxu0
    %1616 = vmatprep.mubr.f32.mxu0 0.0
    %1617 = vmatmul.mubr.f32.gmra.mxu0 %v1275
    %v1618 = vpop.f32.mrf.mxu0
    %v1619 = vadd.f32 0.0, %v1618
    %v1620 = vpop.f32.mrf.mxu0
    %1621 = vmatprep.mubr.f32.mxu0 0.0
    %1622 = vmatmul.mubr.f32.gmra.mxu0 %v1280
    %v1623 = vpop.f32.mrf.mxu0
    %v1624 = vadd.f32 0.0, %v1623
    %v1625 = vpop.f32.mrf.mxu0
    %1626 = vdwg.mxu0
    %v1627 = vadd.f32 %v1544, %v1614
    %v1628 = vadd.f32 %v1545, %v1619
    %v1629 = vadd.f32 %v1546, %v1624
    %1630 = vmatprep.subr.mxu0 0.0
    %1631 = vmatpush1.msra.mxu0 %v919
    %1632 = vmatprep.subr.mxu0 0.0
    %1633 = vmatpush1.msra.mxu0 %v918
    %1634 = vmatprep.subr.mxu0 0.0
    %1635 = vmatpush1.msra.mxu0 %v917
    %1636 = vmatprep.subr.mxu0 0.0
    %1637 = vmatpush1.msra.mxu0 %v916
    %1638 = vmatprep.subr.mxu0 0.0
    %1639 = vmatpush1.msra.mxu0 %v915
    %1640 = vmatprep.subr.mxu0 0.0
    %1641 = vmatpush1.msra.mxu0 %v914
    %1642 = vmatprep.subr.mxu0 0.0
    %1643 = vmatpush1.msra.mxu0 %v913
    %1644 = vmatprep.subr.mxu0 0.0
    %1645 = vmatpush1.msra.mxu0 %v912
    %1646 = vmatprep.subr.mxu0 0.0
    %1647 = vmatpush1.msra.mxu0 %v911
    %1648 = vmatprep.subr.mxu0 0.0
    %1649 = vmatpush1.msra.mxu0 %v910
    %1650 = vmatprep.subr.mxu0 0.0
    %1651 = vmatpush1.msra.mxu0 %v909
    %1652 = vmatprep.subr.mxu0 0.0
    %1653 = vmatpush1.msra.mxu0 %v908
    %1654 = vmatprep.subr.mxu0 0.0
    %1655 = vmatpush1.msra.mxu0 %v907
    %1656 = vmatprep.subr.mxu0 0.0
    %1657 = vmatpush1.msra.mxu0 %v906
    %1658 = vmatprep.subr.mxu0 0.0
    %1659 = vmatpush1.msra.mxu0 %v905
    %1660 = vmatprep.subr.mxu0 0.0
    %1661 = vmatpush1.msra.mxu0 %v904
    %1662 = vmatprep.subr.mxu0 0.0
    %1663 = vmatpush2.msra.mxu0 0.0
    %1664 = vmatprep.subr.mxu0 0.0
    %1665 = vmatpush2.msra.mxu0 0.0
    %1666 = vmatprep.subr.mxu0 0.0
    %1667 = vmatpush2.msra.mxu0 0.0
    %1668 = vmatprep.subr.mxu0 0.0
    %1669 = vmatpush2.msra.mxu0 0.0
    %1670 = vmatprep.subr.mxu0 0.0
    %1671 = vmatpush2.msra.mxu0 0.0
    %1672 = vmatprep.subr.mxu0 0.0
    %1673 = vmatpush2.msra.mxu0 0.0
    %1674 = vmatprep.subr.mxu0 0.0
    %1675 = vmatpush2.msra.mxu0 0.0
    %1676 = vmatprep.subr.mxu0 0.0
    %1677 = vmatpush2.msra.mxu0 0.0
    %1678 = vmatprep.subr.mxu0 0.0
    %1679 = vmatpush2.msra.mxu0 0.0
    %1680 = vmatprep.subr.mxu0 0.0
    %1681 = vmatpush2.msra.mxu0 0.0
    %1682 = vmatprep.subr.mxu0 0.0
    %1683 = vmatpush2.msra.mxu0 0.0
    %1684 = vmatprep.subr.mxu0 0.0
    %1685 = vmatpush2.msra.mxu0 0.0
    %1686 = vmatprep.subr.mxu0 0.0
    %1687 = vmatpush2.msra.mxu0 0.0
    %1688 = vmatprep.subr.mxu0 0.0
    %1689 = vmatpush2.msra.mxu0 0.0
    %1690 = vmatprep.subr.mxu0 0.0
    %1691 = vmatpush2.msra.mxu0 0.0
    %1692 = vmatprep.subr.mxu0 0.0
    %1693 = vmatpush2.msra.mxu0 0.0
    %1694 = vmatprep.mubr.f32.mxu0 0.0
    %1695 = vmatmul.mubr.f32.gmra.mxu0 %v1285
    %v1696 = vpop.f32.mrf.mxu0
    %v1697 = vadd.f32 0.0, %v1696
    %v1698 = vpop.f32.mrf.mxu0
    %1699 = vmatprep.mubr.f32.mxu0 0.0
    %1700 = vmatmul.mubr.f32.gmra.mxu0 %v1290
    %v1701 = vpop.f32.mrf.mxu0
    %v1702 = vadd.f32 0.0, %v1701
    %v1703 = vpop.f32.mrf.mxu0
    %1704 = vmatprep.mubr.f32.mxu0 0.0
    %1705 = vmatmul.mubr.f32.gmra.mxu0 %v1295
    %v1706 = vpop.f32.mrf.mxu0
    %v1707 = vadd.f32 0.0, %v1706
    %v1708 = vpop.f32.mrf.mxu0
    %1709 = vdwg.mxu0
    %v1710 = vadd.f32 %v1627, %v1697
    %v1711 = vadd.f32 %v1628, %v1702
    %v1712 = vadd.f32 %v1629, %v1707
    %vm1713 = vcmp.gt.f32.partialorder %v1710, 0.0
    %vm1714 = vcmp.gt.f32.partialorder %v1711, 0.0
    %vm1715 = vcmp.gt.f32.partialorder %v1712, 0.0
    %v1716 = vmin.f32 %v1710, 0.0
    %v1717 = vmin.f32 %v1711, 0.0
    %v1718 = vmin.f32 %v1712, 0.0
    %v1719 = vmul.f32 %v1716, 1.442695
    %v1720 = vpow.pop %v1719
    %v1721 = vmul.f32 %v1717, 1.442695
    %v1722 = vpow.pop %v1721
    %v1723 = vmul.f32 %v1718, 1.442695
    %v1724 = vpow.pop %v1723
    %v1725 = vsub.f32 %v1720, 1.0
    %v1726 = vsub.f32 %v1722, 1.0
    %v1727 = vsub.f32 %v1724, 1.0
    %v1728 = vsel %vm1713, %v1710, %v1725
    %v1729 = vsel %vm1714, %v1711, %v1726
    %v1730 = vsel %vm1715, %v1712, %v1727
    %v1731 = vmul.f32 %v1728, %v197
    %v1732 = vmul.f32 %v1729, %v197
    %v1733 = vmul.f32 %v1730, %v197
    %1734 = vadd.xlane.f32.xlu0 %v1731
    %v1735 = vpop.xlane.xlu0 %1734
    %1736 = vadd.xlane.f32.xlu0 %v1732
    %v1737 = vpop.xlane.xlu0 %1736
    %1738 = vadd.xlane.f32.xlu0 %v1733
    %v1739 = vpop.xlane.xlu0 %1738
    %v1740 = vmul.f32 %v1735, 0.03125
    %v1741 = vmul.f32 %v1737, 0.03125
    %v1742 = vmul.f32 %v1739, 0.03125
    %v1743 = vsub.f32 %v1728, %v1740
    %v1744 = vsub.f32 %v1729, %v1741
    %v1745 = vsub.f32 %v1730, %v1742
    %v1746 = vmul.f32 %v1743, %v197
    %v1747 = vmul.f32 %v1744, %v197
    %v1748 = vmul.f32 %v1745, %v197
    %v1749 = vmul.f32 %v1746, %v1746
    %v1750 = vmul.f32 %v1747, %v1747
    %v1751 = vmul.f32 %v1748, %v1748
    %1752 = vadd.xlane.f32.xlu0 %v1749
    %v1753 = vpop.xlane.xlu0 %1752
    %1754 = vadd.xlane.f32.xlu0 %v1750
    %v1755 = vpop.xlane.xlu0 %1754
    %1756 = vadd.xlane.f32.xlu0 %v1751
    %v1757 = vpop.xlane.xlu0 %1756
    %v1758 = vmul.f32 %v1753, 0.03125
    %v1759 = vmul.f32 %v1755, 0.03125
    %v1760 = vmul.f32 %v1757, 0.03125
    %v1761 = vadd.f32 %v1758, 1e-05
    %v1762 = vadd.f32 %v1759, 1e-05
    %v1763 = vadd.f32 %v1760, 1e-05
    %v1764 = vrsqrt.pop %v1761
    %v1765 = vrsqrt.pop %v1762
    %v1766 = vrsqrt.pop %v1763
    %v1767 = vmul.f32 %v1746, %v1764
    %v1768 = vmul.f32 %v1747, %v1765
    %v1769 = vmul.f32 %v1748, %v1766
    %v1770 = vmul.f32 %v1767, %v1064
    %v1771 = vmul.f32 %v1768, %v1064
    %v1772 = vmul.f32 %v1769, %v1064
    %v1773 = vadd.f32 %v1770, %v1073
    %v1774 = vadd.f32 %v1771, %v1073
    %v1775 = vadd.f32 %v1772, %v1073
    %v1776 = vld [vmem:[%s8] sm:$0xff]
    %v1778 = vsel %vm318, %v1776, 0
    %1780 = vmatprep.subr.mxu0 0.0
    %1781 = vmatpush1.msra.mxu0 0.0
    %1782 = vmatprep.subr.mxu0 0.0
    %1783 = vmatpush1.msra.mxu0 0.0
    %1784 = vmatprep.subr.mxu0 0.0
    %1785 = vmatpush1.msra.mxu0 0.0
    %1786 = vmatprep.subr.mxu0 0.0
    %1787 = vmatpush1.msra.mxu0 0.0
    %1788 = vmatprep.subr.mxu0 0.0
    %1789 = vmatpush1.msra.mxu0 0.0
    %1790 = vmatprep.subr.mxu0 0.0
    %1791 = vmatpush1.msra.mxu0 0.0
    %1792 = vmatprep.subr.mxu0 0.0
    %1793 = vmatpush1.msra.mxu0 0.0
    %1794 = vmatprep.subr.mxu0 0.0
    %1795 = vmatpush1.msra.mxu0 0.0
    %1796 = vmatprep.subr.mxu0 0.0
    %1797 = vmatpush1.msra.mxu0 0.0
    %1798 = vmatprep.subr.mxu0 0.0
    %1799 = vmatpush1.msra.mxu0 0.0
    %1800 = vmatprep.subr.mxu0 0.0
    %1801 = vmatpush1.msra.mxu0 0.0
    %1802 = vmatprep.subr.mxu0 0.0
    %1803 = vmatpush1.msra.mxu0 0.0
    %1804 = vmatprep.subr.mxu0 0.0
    %1805 = vmatpush1.msra.mxu0 0.0
    %1806 = vmatprep.subr.mxu0 0.0
    %1807 = vmatpush1.msra.mxu0 %v1775
    %1808 = vmatprep.subr.mxu0 0.0
    %1809 = vmatpush1.msra.mxu0 %v1774
    %1810 = vmatprep.subr.mxu0 0.0
    %1811 = vmatpush1.msra.mxu0 %v1773
    %1812 = vmatprep.subr.mxu0 0.0
    %1813 = vmatpush2.msra.mxu0 0.0
    %1814 = vmatprep.subr.mxu0 0.0
    %1815 = vmatpush2.msra.mxu0 0.0
    %1816 = vmatprep.subr.mxu0 0.0
    %1817 = vmatpush2.msra.mxu0 0.0
    %1818 = vmatprep.subr.mxu0 0.0
    %1819 = vmatpush2.msra.mxu0 0.0
    %1820 = vmatprep.subr.mxu0 0.0
    %1821 = vmatpush2.msra.mxu0 0.0
    %1822 = vmatprep.subr.mxu0 0.0
    %1823 = vmatpush2.msra.mxu0 0.0
    %1824 = vmatprep.subr.mxu0 0.0
    %1825 = vmatpush2.msra.mxu0 0.0
    %1826 = vmatprep.subr.mxu0 0.0
    %1827 = vmatpush2.msra.mxu0 0.0
    %1828 = vmatprep.subr.mxu0 0.0
    %1829 = vmatpush2.msra.mxu0 0.0
    %1830 = vmatprep.subr.mxu0 0.0
    %1831 = vmatpush2.msra.mxu0 0.0
    %1832 = vmatprep.subr.mxu0 0.0
    %1833 = vmatpush2.msra.mxu0 0.0
    %1834 = vmatprep.subr.mxu0 0.0
    %1835 = vmatpush2.msra.mxu0 0.0
    %1836 = vmatprep.subr.mxu0 0.0
    %1837 = vmatpush2.msra.mxu0 0.0
    %1838 = vmatprep.subr.mxu0 0.0
    %1839 = vmatpush2.msra.mxu0 0.0
    %1840 = vmatprep.subr.mxu0 0.0
    %1841 = vmatpush2.msra.mxu0 0.0
    %1842 = vmatprep.subr.mxu0 0.0
    %1843 = vmatpush2.msra.mxu0 0.0
    %1844 = vmatprep.mubr.f32.mxu0 0.0
    %1845 = vmatmul.mubr.f32.gmra.mxu0 %v1778
    %v1846 = vpop.f32.mrf.mxu0
    %v1847 = vadd.f32 0.0, %v1846
    %v1848 = vpop.f32.mrf.mxu0
    %1849 = vdwg.mxu0
    %v1850 = vld [vmem:[#allocation8] sm:$0xff]
    %v1851 = vld [vmem:[#allocation8 + $0x8] sm:$0xff]
    %v1852 = vld [vmem:[#allocation8 + $0x10] sm:$0xff]
    %v1853 = vld [vmem:[#allocation8 + $0x18] sm:$0xff]
    %v1854 = vld [vmem:[#allocation8 + $0x20] sm:$0xff]
    %v1855 = vld [vmem:[#allocation8 + $0x28] sm:$0xff]
    %v1856 = vld [vmem:[#allocation8 + $0x30] sm:$0xff]
    %v1857 = vld [vmem:[#allocation8 + $0x38] sm:$0xff]
    %v1858 = vld [vmem:[#allocation8 + $0x40] sm:$0xff]
    %v1859 = vld [vmem:[#allocation8 + $0x48] sm:$0xff]
    %v1860 = vld [vmem:[#allocation8 + $0x50] sm:$0xff]
    %v1861 = vld [vmem:[#allocation8 + $0x58] sm:$0xff]
    %v1862 = vld [vmem:[#allocation8 + $0x60] sm:$0xff]
    %v1863 = vld [vmem:[#allocation8 + $0x68] sm:$0xff]
    %v1864 = vld [vmem:[#allocation8 + $0x70] sm:$0xff]
    %v1865 = vld [vmem:[#allocation8 + $0x78] sm:$0xff]
    %v1866 = vld [vmem:[%s10] sm:$0x1]
    %v1868 = vlaneseq
    %v1869 = vshrl.u32 %v1868, 7
    %v1870 = vsub.s32 0, %v1869
    %v1871 = vrot.slane %v1866, %v1870
    %1873 = vmatprep.subr.mxu0 0.0
    %1874 = vmatpush1.msra.mxu0 %v1865
    %1875 = vmatprep.subr.mxu0 0.0
    %1876 = vmatpush1.msra.mxu0 %v1864
    %1877 = vmatprep.subr.mxu0 0.0
    %1878 = vmatpush1.msra.mxu0 %v1863
    %1879 = vmatprep.subr.mxu0 0.0
    %1880 = vmatpush1.msra.mxu0 %v1862
    %1881 = vmatprep.subr.mxu0 0.0
    %1882 = vmatpush1.msra.mxu0 %v1861
    %1883 = vmatprep.subr.mxu0 0.0
    %1884 = vmatpush1.msra.mxu0 %v1860
    %1885 = vmatprep.subr.mxu0 0.0
    %1886 = vmatpush1.msra.mxu0 %v1859
    %1887 = vmatprep.subr.mxu0 0.0
    %1888 = vmatpush1.msra.mxu0 %v1858
    %1889 = vmatprep.subr.mxu0 0.0
    %1890 = vmatpush1.msra.mxu0 %v1857
    %1891 = vmatprep.subr.mxu0 0.0
    %1892 = vmatpush1.msra.mxu0 %v1856
    %1893 = vmatprep.subr.mxu0 0.0
    %1894 = vmatpush1.msra.mxu0 %v1855
    %1895 = vmatprep.subr.mxu0 0.0
    %1896 = vmatpush1.msra.mxu0 %v1854
    %1897 = vmatprep.subr.mxu0 0.0
    %1898 = vmatpush1.msra.mxu0 %v1853
    %1899 = vmatprep.subr.mxu0 0.0
    %1900 = vmatpush1.msra.mxu0 %v1852
    %1901 = vmatprep.subr.mxu0 0.0
    %1902 = vmatpush1.msra.mxu0 %v1851
    %1903 = vmatprep.subr.mxu0 0.0
    %1904 = vmatpush1.msra.mxu0 %v1850
    %1905 = vmatprep.subr.mxu0 0.0
    %1906 = vmatpush2.msra.mxu0 0.0
    %1907 = vmatprep.subr.mxu0 0.0
    %1908 = vmatpush2.msra.mxu0 0.0
    %1909 = vmatprep.subr.mxu0 0.0
    %1910 = vmatpush2.msra.mxu0 0.0
    %1911 = vmatprep.subr.mxu0 0.0
    %1912 = vmatpush2.msra.mxu0 0.0
    %1913 = vmatprep.subr.mxu0 0.0
    %1914 = vmatpush2.msra.mxu0 0.0
    %1915 = vmatprep.subr.mxu0 0.0
    %1916 = vmatpush2.msra.mxu0 0.0
    %1917 = vmatprep.subr.mxu0 0.0
    %1918 = vmatpush2.msra.mxu0 0.0
    %1919 = vmatprep.subr.mxu0 0.0
    %1920 = vmatpush2.msra.mxu0 0.0
    %1921 = vmatprep.subr.mxu0 0.0
    %1922 = vmatpush2.msra.mxu0 0.0
    %1923 = vmatprep.subr.mxu0 0.0
    %1924 = vmatpush2.msra.mxu0 0.0
    %1925 = vmatprep.subr.mxu0 0.0
    %1926 = vmatpush2.msra.mxu0 0.0
    %1927 = vmatprep.subr.mxu0 0.0
    %1928 = vmatpush2.msra.mxu0 0.0
    %1929 = vmatprep.subr.mxu0 0.0
    %1930 = vmatpush2.msra.mxu0 0.0
    %1931 = vmatprep.subr.mxu0 0.0
    %1932 = vmatpush2.msra.mxu0 0.0
    %1933 = vmatprep.subr.mxu0 0.0
    %1934 = vmatpush2.msra.mxu0 0.0
    %1935 = vmatprep.subr.mxu0 0.0
    %1936 = vmatpush2.msra.mxu0 0.0
    %1937 = vmatprep.mubr.f32.mxu0 0.0
    %1938 = vmatmul.mubr.f32.gmra.mxu0 %v1847
    %v1939 = vpop.f32.mrf.mxu0
    %v1940 = vadd.f32 %v1871, %v1939
    %v1941 = vpop.f32.mrf.mxu0
    %1942 = vdwg.mxu0
    %1943 = vst [vmem:[#allocation10] sm:$0xff] %v1940
    // Predicated region
    $region62: #{tpu_custom_call.1} parent=1 // pred_check
      _
    $region63: #{tpu_custom_call.1} parent=1 // pred_check_branch
      %1945 = sbr.rel (0) target = $region65
    $region64: #{tpu_custom_call.1} parent=1 // pred_region
      %s1947 = ssub.s32 128, 128
      %1948 = vsyncadd [#allocation4], %s1947
      %s1950 = sshll.u32 [#allocation10], 4
      %s1951 = int_to_ptr.vmem [resolvable:$true] %s1950
      %1953 = dma.vmem_to_hbm [thread:$0]  %s1951, 128, %s11, [#allocation4]
    $region65: #{tpu_custom_call.1} parent=1 // pred_fallthru
      _
    // Predicated region
    $region66: #{tpu_custom_call.1} parent=1 // pred_check
      _
    $region67: #{tpu_custom_call.1} parent=1 // pred_check_branch
      %1955 = sbr.rel (0) target = $region69
    $region68: #{tpu_custom_call.1} parent=1 // pred_region
      %1956 = dma.done [#allocation4], 128
    $region69: #{tpu_custom_call.1} parent=1 // pred_fallthru
      _
    %1957 = vsyncpa [#allocation3], 1
    %1958 = vsyncpa [#allocation6], 1
    %1959 = vsyncpa [#allocation9], 1
    %1960 = vsyncpa [#allocation4], 1

</llo_original>
